<compile_context>
chip_gen: v5e
topology: v5e:2x2
jax: 0.10.0
libtpu: 0.0.40
codegen_flags: <defaults>
</compile_context>

<pallas_src>
import functools

import jax
import jax.numpy as jnp
from jax.experimental import pallas as pl
from jax.experimental.pallas import tpu as pltpu

_EPS = 1e-5


# ------------------------- fused Pallas kernel -------------------------

def _bottleneck_kernel(x_ref, w1_ref, b1_ref, w2_ref, b2_ref, w3_ref, b3_ref,
                       x_hbm_ref, o_ref, cat_ref, halo_ref, sem_ref,
                       *, H, W, TILE_H, HW):
    """One grid step = one (image, row-tile).

    x_ref    : (TILE_H*W, Cin)      bf16  current tile of x (also the shortcut)
    x_hbm_ref: (N*H*W, Cin)         bf16  whole x in HBM (only 2 halo rows DMA'd)
    o_ref    : (TILE_H*W, Cout)     bf16
    cat_ref  : ((TILE_H+4)*W, 3*Cm) bf16  tap-concat staging of the conv1 output
    halo_ref : (2*W, Cin)           bf16  the two halo rows of x
    """
    n = pl.program_id(0)
    t = pl.program_id(1)
    T = pl.num_programs(1)
    M = TILE_H * W                               # flattened spatial rows per step
    Cm = w1_ref.shape[1]

    # ---- kick off the two 1-row halo DMAs first; they overlap with conv1 below ----
    row0 = t * TILE_H
    r_top = jnp.maximum(row0 - 1, 0)             # clamped; result discarded at top edge
    r_bot = jnp.minimum(row0 + TILE_H, H - 1)    # clamped; result discarded at bottom edge
    base = n * HW
    cp_top = pltpu.make_async_copy(x_hbm_ref.at[pl.ds(base + r_top * W, W), :],
                                   halo_ref.at[pl.ds(0, W), :], sem_ref.at[0])
    cp_bot = pltpu.make_async_copy(x_hbm_ref.at[pl.ds(base + r_bot * W, W), :],
                                   halo_ref.at[pl.ds(W, W), :], sem_ref.at[1])
    cp_top.start()
    cp_bot.start()

    w1 = w1_ref[...]
    b1 = b1_ref[...]

    # ---- conv1 (1x1) + bn1 + relu on the tile's own rows (BN scale folded into w1) ----
    h1_c = jnp.maximum(
        jnp.dot(x_ref[...], w1, preferred_element_type=jnp.float32) + b1,
        0.0).astype(jnp.bfloat16)                                    # (M, Cm)

    # ---- conv1 on the two halo rows; rows outside the image are conv2's zero padding ----
    cp_top.wait()
    cp_bot.wait()
    h1_halo = jnp.maximum(
        jnp.dot(halo_ref[...], w1, preferred_element_type=jnp.float32) + b1,
        0.0)                                                         # (2W, Cm) f32
    h1_top = jnp.where(t > 0, h1_halo[:W], 0.0).astype(jnp.bfloat16)
    h1_bot = jnp.where(t < T - 1, h1_halo[W:], 0.0).astype(jnp.bfloat16)

    # ---- stage h1 into the tap-concat scratch --------------------------------------
    # Group dy (columns [dy*Cm, (dy+1)*Cm)) holds h1 written at row offset (2-dy)*W, so
    # one row-slice of cat_ref is a (M, 3*Cm) conv2 operand covering all three dy taps.
    for dy in range(3):
        c = (2 - dy) * W
        col = pl.ds(dy * Cm, Cm)
        cat_ref[pl.ds(c, W), col] = h1_top
        cat_ref[pl.ds(c + W, M), col] = h1_c
        cat_ref[pl.ds(c + W + M, W), col] = h1_bot

    # ---- conv2 (3x3, stride 1, pad 1) + bn2 + relu : 3 matmuls with K = 3*Cm ---------
    xcol = jax.lax.broadcasted_iota(jnp.int32, (M, 1), 0) % W
    not_left = xcol > 0                          # taps at x-1 are invalid in column 0
    not_right = xcol < (W - 1)                   # taps at x+1 are invalid in column W-1
    zeros_op = jnp.zeros((M, 3 * Cm), jnp.bfloat16)

    acc = jnp.zeros((M, Cm), jnp.float32)
    for dx in range(3):
        op = cat_ref[pl.ds(2 * W - 1 + dx, M), :]                    # (M, 3*Cm) bf16
        if dx == 0:
            op = jnp.where(not_left, op, zeros_op)
        elif dx == 2:
            op = jnp.where(not_right, op, zeros_op)
        acc = acc + jnp.dot(op, w2_ref[dx], preferred_element_type=jnp.float32)
    h2 = jnp.maximum(acc + b2_ref[...], 0.0).astype(jnp.bfloat16)    # (M, Cm)

    # ---- conv3 (1x1) + bn3 + relu (this module applies ReLU before the residual add) ----
    h3 = jnp.maximum(
        jnp.dot(h2, w3_ref[...], preferred_element_type=jnp.float32) + b3_ref[...],
        0.0)                                                         # (M, Cout) f32

    # ---- residual add (identity shortcut; x re-read here, not kept live) + final relu ----
    o_ref[...] = jnp.maximum(h3 + x_ref[...].astype(jnp.float32), 0.0).astype(o_ref.dtype)


# ------------------------- wrapper -------------------------

def _pick_tile_h(H, W, Cm):
    """Largest divisor of H whose tile keeps the f32 conv2 accumulator ~within vregs."""
    best = 1
    for th in range(1, H + 1):
        if H % th:
            continue
        rows = th * W
        if rows % 8 == 0 and rows * max(Cm, 1) * 4 <= 256 * 1024 and rows <= 8192:
            best = th
    return best


def bottleneck_forward(x_nchw, params, tile_h=None):
    """Forward pass of Bottleneck (stride=1, downsample=None, inference-mode BN)."""
    w1, b1 = params["w1"], params["b1"]
    w2c, b2 = params["w2cat"], params["b2"]
    w3, b3 = params["w3"], params["b3"]

    N, Cin, H, W = x_nchw.shape
    Cm = w1.shape[1]
    Cout = w3.shape[1]
    assert Cin == Cout, "identity shortcut requires in_channels == 4*out_channels"

    if tile_h is None:
        tile_h = _pick_tile_h(H, W, Cm)
    assert H % tile_h == 0, "H must be divisible by tile_h"   # TODO(synk): ragged last tile
    T = H // tile_h
    M = tile_h * W
    HW = H * W
    assert M % 8 == 0, "tile rows (tile_h*W) must be a multiple of 8"

    # NCHW -> (N*H*W, C) bf16: channels on the lane dim, bf16 halves HBM traffic.
    x = jnp.transpose(x_nchw, (0, 2, 3, 1)).reshape(N * HW, Cin).astype(jnp.bfloat16)

    kernel = functools.partial(_bottleneck_kernel, H=H, W=W, TILE_H=tile_h, HW=HW)

    # --- explicit VMEM budget for the chosen tile (double-buffered tiles + weights + scratch) ---
    bpe = 2  # bf16
    wbytes = (Cin * Cm + 9 * Cm * Cm + Cm * Cout) * bpe + (2 * Cm + Cout) * 4
    per_step = (2 * M * Cin * bpe + 2 * M * Cout * bpe + 2 * wbytes
                + (M + 4 * W) * 3 * Cm * bpe + 2 * W * Cin * bpe)
    vmem_limit = int(min(64 << 20, max(16 << 20, 2 * per_step + (1 << 20))))

    flops = 2 * N * HW * (Cin * Cm + 9 * Cm * Cm + Cm * Cout) + 6 * N * HW * Cout
    bytes_accessed = (N * HW * (Cin + Cout) + Cin * Cm + 9 * Cm * Cm + Cm * Cout) * bpe

    out = pl.pallas_call(
        kernel,
        out_shape=jax.ShapeDtypeStruct((N * HW, Cout), jnp.bfloat16),
        grid=(N, T),
        in_specs=[
            pl.BlockSpec((M, Cin), lambda n, t: (n * T + t, 0)),      # x tile / shortcut
            # Weight/bias index_maps are constant across the grid, so Pallas DMAs them
            # once (pipeline_mode=pl.Buffered(1) could reclaim the 2nd buffer if tight).
            pl.BlockSpec((Cin, Cm), lambda n, t: (0, 0)),             # w1 (bf16, BN folded)
            pl.BlockSpec((1, Cm), lambda n, t: (0, 0)),               # b1
            pl.BlockSpec((3, 3 * Cm, Cm), lambda n, t: (0, 0, 0)),    # w2 tap-concat
            pl.BlockSpec((1, Cm), lambda n, t: (0, 0)),               # b2
            pl.BlockSpec((Cm, Cout), lambda n, t: (0, 0)),            # w3
            pl.BlockSpec((1, Cout), lambda n, t: (0, 0)),             # b3
            pl.BlockSpec(memory_space=pl.ANY),                        # whole x (halo DMAs)
        ],
        out_specs=pl.BlockSpec((M, Cout), lambda n, t: (n * T + t, 0)),
        scratch_shapes=[
            pltpu.VMEM(((tile_h + 4) * W, 3 * Cm), jnp.bfloat16),     # tap-concat h1
            pltpu.VMEM((2 * W, Cin), jnp.bfloat16),                   # halo x rows
            pltpu.SemaphoreType.DMA((2,)),
        ],
        compiler_params=pltpu.CompilerParams(
            dimension_semantics=("parallel", "parallel"),
            vmem_limit_bytes=vmem_limit,
        ),
        cost_estimate=pl.CostEstimate(flops=flops, transcendentals=0,
                                      bytes_accessed=bytes_accessed),
    )(x, w1, b1, w2c, b2, w3, b3, x)

    out = out.reshape(N, H, W, Cout)
    return jnp.transpose(out, (0, 3, 1, 2))      # NHWC -> NCHW (bf16)


# ------------------------- parameters (torch layout) + BN folding -------------------------

def init_params(key, in_channels, out_channels):
    """Deterministic synthetic parameters in PyTorch layouts."""
    Cm = out_channels
    Cout = out_channels * 4                      # expansion = 4
    ks = jax.random.split(key, 15)

    w1_t = 0.1 * jax.random.normal(ks[0], (Cm, in_channels, 1, 1), jnp.float32)
    w2_t = 0.1 * jax.random.normal(ks[1], (Cm, Cm, 3, 3), jnp.float32)
    w3_t = 0.1 * jax.random.normal(ks[2], (Cout, Cm, 1, 1), jnp.float32)

    def bn_params(kg, kb, km, kv, c):
        gamma = 1.0 + 0.1 * jax.random.normal(kg, (c,), jnp.float32)
        beta = 0.05 * jax.random.normal(kb, (c,), jnp.float32)
        mean = 0.1 * jax.random.normal(km, (c,), jnp.float32)
        var = 1.0 + 0.1 * jax.random.uniform(kv, (c,), jnp.float32)
        return gamma, beta, mean, var

    return dict(
        w1=w1_t, w2=w2_t, w3=w3_t,
        bn1=bn_params(ks[3], ks[4], ks[5], ks[6], Cm),
        bn2=bn_params(ks[7], ks[8], ks[9], ks[10], Cm),
        bn3=bn_params(ks[11], ks[12], ks[13], ks[14], Cout),
    )


def fold_params(raw):
    """Fold inference-mode BN into conv weights (scale) + bias; build bf16 MXU layouts."""
    def fold(bn):
        gamma, beta, mean, var = bn
        s = gamma / jnp.sqrt(var + _EPS)
        return s, beta - mean * s

    s1, b1 = fold(raw["bn1"])
    s2, b2 = fold(raw["bn2"])
    s3, b3 = fold(raw["bn3"])
    Cm = raw["w1"].shape[0]

    # conv1: (Cm, Cin, 1, 1) -> (Cin, Cm)
    w1 = (raw["w1"][:, :, 0, 0].T * s1[None, :]).astype(jnp.bfloat16)
    # conv2: (O, I, kH, kW) -> (kW, kH, I, O) -> (3, 3*Cm, Cm); w2cat[dx] stacks the
    # dy = 0,1,2 tap matrices along rows (matches the tap-concat operand column groups).
    w2 = jnp.transpose(raw["w2"], (3, 2, 1, 0)) * s2[None, None, None, :]
    w2cat = w2.reshape(3, 3 * Cm, Cm).astype(jnp.bfloat16)
    # conv3: (Cout, Cm, 1, 1) -> (Cm, Cout)
    w3 = (raw["w3"][:, :, 0, 0].T * s3[None, :]).astype(jnp.bfloat16)

    return dict(
        w1=w1, w2cat=w2cat, w3=w3,
        b1=b1.reshape(1, -1).astype(jnp.float32),
        b2=b2.reshape(1, -1).astype(jnp.float32),
        b3=b3.reshape(1, -1).astype(jnp.float32),
    )


# ------------------------- pure-JAX reference (independent path) -------------------------

def bottleneck_ref(x_nchw, raw):
    x = jnp.transpose(x_nchw, (0, 2, 3, 1)).astype(jnp.float32)      # NHWC, f32

    def bn(v, p):
        gamma, beta, mean, var = p
        return gamma * (v - mean) / jnp.sqrt(var + _EPS) + beta

    def conv(v, w_t, padding):
        w = jnp.transpose(w_t, (2, 3, 1, 0))                         # OIHW -> HWIO
        return jax.lax.conv_general_dilated(
            v, w, window_strides=(1, 1), padding=padding,
            dimension_numbers=("NHWC", "HWIO", "NHWC"))

    out = jax.nn.relu(bn(conv(x, raw["w1"], "VALID"), raw["bn1"]))
    out = jax.nn.relu(bn(conv(out, raw["w2"], "SAME"), raw["bn2"]))
    out = jax.nn.relu(bn(conv(out, raw["w3"], "VALID"), raw["bn3"]))
    out = jax.nn.relu(out + x)
    return jnp.transpose(out, (0, 3, 1, 2))


# ------------------------- main -------------------------

if __name__ == "__main__":
    key = jax.random.PRNGKey(0)
    kx, kp = jax.random.split(key)

    # expansion * out_channels == in_channels -> identity shortcut
    in_channels, out_channels = 16, 4
    N, H, W = 2, 16, 16

    x = jax.random.normal(kx, (N, in_channels, H, W), dtype=jnp.float32)
    # The kernel consumes bf16 activations; feed bf16-rounded values to both paths.
    x = x.astype(jnp.bfloat16).astype(jnp.float32)

    raw = init_params(kp, in_channels, out_channels)
    params = fold_params(raw)

    # tile_h=4 -> grid (N, 4): exercises interior halos plus top/bottom boundary tiles.
    fwd = jax.jit(functools.partial(bottleneck_forward, tile_h=4))
    out = jax.block_until_ready(fwd(x, params))
    assert out.shape == (N, in_channels, H, W)

    ref = jax.block_until_ready(bottleneck_ref(x, raw))
    max_err = float(jnp.max(jnp.abs(out.astype(jnp.float32) - ref)))
    assert max_err < 7.5e-2, f"mismatch vs reference: max abs err = {max_err}"

    print("KERNEL_OK")
</pallas_src>

<mosaic_0001>
module attributes {stable_mosaic.version = 11 : i64} {
  func.func @_bottleneck_kernel(%arg0: i32, %arg1: i32, %arg2: memref<64x16xbf16, #tpu.memory_space<vmem>>, %arg3: memref<16x4xbf16, #tpu.memory_space<vmem>>, %arg4: memref<1x4xf32, #tpu.memory_space<vmem>>, %arg5: memref<3x12x4xbf16, #tpu.memory_space<vmem>>, %arg6: memref<1x4xf32, #tpu.memory_space<vmem>>, %arg7: memref<4x16xbf16, #tpu.memory_space<vmem>>, %arg8: memref<1x16xf32, #tpu.memory_space<vmem>>, %arg9: memref<512x16xbf16, #tpu.memory_space<any>>, %arg10: memref<64x16xbf16, #tpu.memory_space<vmem>>, %arg11: memref<128x12xbf16, #tpu.memory_space<vmem>>, %arg12: memref<32x16xbf16, #tpu.memory_space<vmem>>, %arg13: memref<2x!tpu.dma_semaphore, #tpu.memory_space<semaphore_mem>>) attributes {dimension_semantics = [#tpu.dimension_semantics<parallel>, #tpu.dimension_semantics<parallel>], iteration_bounds = array<i64: 2, 4>, scalar_prefetch = 0 : i64, scratch_operands = 3 : i64, tpu.core_type = #tpu.core_type<tc>, window_params = [{transform_indices = @transform_0, window_bounds = array<i64: 64, 16>}, {pipeline_mode = #tpu.pipeline_mode<synchronous>, transform_indices = @transform_1, window_bounds = array<i64: 16, 4>}, {pipeline_mode = #tpu.pipeline_mode<synchronous>, transform_indices = @transform_2, window_bounds = array<i64: 1, 4>}, {pipeline_mode = #tpu.pipeline_mode<synchronous>, transform_indices = @transform_3, window_bounds = array<i64: 3, 12, 4>}, {pipeline_mode = #tpu.pipeline_mode<synchronous>, transform_indices = @transform_4, window_bounds = array<i64: 1, 4>}, {pipeline_mode = #tpu.pipeline_mode<synchronous>, transform_indices = @transform_5, window_bounds = array<i64: 4, 16>}, {pipeline_mode = #tpu.pipeline_mode<synchronous>, transform_indices = @transform_6, window_bounds = array<i64: 1, 16>}, {}, {transform_indices = @transform_8, window_bounds = array<i64: 64, 16>}]} {
    %c4_i32 = arith.constant 4 : i32
    %0 = arith.muli %arg1, %c4_i32 : i32
    %c1_i32 = arith.constant 1 : i32
    %1 = arith.subi %0, %c1_i32 : i32
    %c0_i32 = arith.constant 0 : i32
    %2 = arith.maxsi %1, %c0_i32 : i32
    %c4_i32_0 = arith.constant 4 : i32
    %3 = arith.addi %0, %c4_i32_0 : i32
    %c15_i32 = arith.constant 15 : i32
    %4 = arith.minsi %3, %c15_i32 : i32
    %c256_i32 = arith.constant 256 : i32
    %5 = arith.muli %arg0, %c256_i32 : i32
    %c16_i32 = arith.constant 16 : i32
    %6 = arith.muli %2, %c16_i32 : i32
    %7 = arith.addi %5, %6 : i32
    %c16_i32_1 = arith.constant 16 : i32
    %8 = arith.muli %4, %c16_i32_1 : i32
    %9 = arith.addi %5, %8 : i32
    %c0_i32_2 = arith.constant 0 : i32
    %c0_i32_3 = arith.constant 0 : i32
    %10 = tpu.memref_slice %arg9[%7, %c0_i32_3] : memref<512x16xbf16, #tpu.memory_space<any>> -> memref<16x16xbf16, #tpu.memory_space<any>>
    %c0_i32_4 = arith.constant 0 : i32
    %c0_i32_5 = arith.constant 0 : i32
    %11 = tpu.memref_slice %arg12[%c0_i32_4, %c0_i32_5] : memref<32x16xbf16, #tpu.memory_space<vmem>> -> memref<16x16xbf16, #tpu.memory_space<vmem>>
    %12 = tpu.memref_slice %arg13[%c0_i32_2] : memref<2x!tpu.dma_semaphore, #tpu.memory_space<semaphore_mem>> -> memref<1x!tpu.dma_semaphore, #tpu.memory_space<semaphore_mem>>
    %13 = tpu.memref_squeeze %12 : memref<1x!tpu.dma_semaphore, #tpu.memory_space<semaphore_mem>> -> memref<!tpu.dma_semaphore, #tpu.memory_space<semaphore_mem>>
    tpu.enqueue_dma source(%10 : memref<16x16xbf16, #tpu.memory_space<any>>) target(%11 : memref<16x16xbf16, #tpu.memory_space<vmem>>) target_semaphore(%13 : memref<!tpu.dma_semaphore, #tpu.memory_space<semaphore_mem>>)
    %c1_i32_6 = arith.constant 1 : i32
    %c0_i32_7 = arith.constant 0 : i32
    %14 = tpu.memref_slice %arg9[%9, %c0_i32_7] : memref<512x16xbf16, #tpu.memory_space<any>> -> memref<16x16xbf16, #tpu.memory_space<any>>
    %c16_i32_8 = arith.constant 16 : i32
    %c0_i32_9 = arith.constant 0 : i32
    %15 = tpu.memref_slice %arg12[%c16_i32_8, %c0_i32_9] : memref<32x16xbf16, #tpu.memory_space<vmem>> -> memref<16x16xbf16, #tpu.memory_space<vmem>>
    %16 = tpu.memref_slice %arg13[%c1_i32_6] : memref<2x!tpu.dma_semaphore, #tpu.memory_space<semaphore_mem>> -> memref<1x!tpu.dma_semaphore, #tpu.memory_space<semaphore_mem>>
    %17 = tpu.memref_squeeze %16 : memref<1x!tpu.dma_semaphore, #tpu.memory_space<semaphore_mem>> -> memref<!tpu.dma_semaphore, #tpu.memory_space<semaphore_mem>>
    tpu.enqueue_dma source(%14 : memref<16x16xbf16, #tpu.memory_space<any>>) target(%15 : memref<16x16xbf16, #tpu.memory_space<vmem>>) target_semaphore(%17 : memref<!tpu.dma_semaphore, #tpu.memory_space<semaphore_mem>>)
    %c0 = arith.constant 0 : index
    %c0_10 = arith.constant 0 : index
    %18 = vector.load %arg3[%c0, %c0_10] : memref<16x4xbf16, #tpu.memory_space<vmem>>, vector<16x4xbf16>
    %c0_11 = arith.constant 0 : index
    %c0_12 = arith.constant 0 : index
    %19 = vector.load %arg4[%c0_11, %c0_12] : memref<1x4xf32, #tpu.memory_space<vmem>>, vector<1x4xf32>
    %c0_13 = arith.constant 0 : index
    %c0_14 = arith.constant 0 : index
    %20 = vector.load %arg2[%c0_13, %c0_14] : memref<64x16xbf16, #tpu.memory_space<vmem>>, vector<64x16xbf16>
    %cst = arith.constant dense<0.000000e+00> : vector<64x4xf32>
    %21 = tpu.matmul %20, %18, %cst {dimension_numbers = #tpu.dot_dimension_numbers<[1], [0], [0], [1], [0, 0, 1, 1], [], []>} : vector<64x16xbf16>, vector<16x4xbf16>, vector<64x4xf32> -> vector<64x4xf32>
    %22 = vector.broadcast %19 : vector<1x4xf32> to vector<64x4xf32>
    %23 = arith.addf %21, %22 : vector<64x4xf32>
    %cst_15 = arith.constant 0.000000e+00 : f32
    %24 = vector.broadcast %cst_15 : f32 to vector<64x4xf32>
    %25 = arith.maximumf %23, %24 : vector<64x4xf32>
    %26 = arith.truncf %25 : vector<64x4xf32> to vector<64x4xbf16>
    %c0_i32_16 = arith.constant 0 : i32
    %c0_i32_17 = arith.constant 0 : i32
    %27 = tpu.memref_slice %arg9[%7, %c0_i32_17] : memref<512x16xbf16, #tpu.memory_space<any>> -> memref<16x16xbf16, #tpu.memory_space<any>>
    %c0_i32_18 = arith.constant 0 : i32
    %c0_i32_19 = arith.constant 0 : i32
    %28 = tpu.memref_slice %arg12[%c0_i32_18, %c0_i32_19] : memref<32x16xbf16, #tpu.memory_space<vmem>> -> memref<16x16xbf16, #tpu.memory_space<vmem>>
    %29 = tpu.memref_slice %arg13[%c0_i32_16] : memref<2x!tpu.dma_semaphore, #tpu.memory_space<semaphore_mem>> -> memref<1x!tpu.dma_semaphore, #tpu.memory_space<semaphore_mem>>
    %30 = tpu.memref_squeeze %29 : memref<1x!tpu.dma_semaphore, #tpu.memory_space<semaphore_mem>> -> memref<!tpu.dma_semaphore, #tpu.memory_space<semaphore_mem>>
    tpu.wait_dma2 semaphore(%30 : memref<!tpu.dma_semaphore, #tpu.memory_space<semaphore_mem>>) src(%27 : memref<16x16xbf16, #tpu.memory_space<any>>) dst(%28 : memref<16x16xbf16, #tpu.memory_space<vmem>>)
    %c1_i32_20 = arith.constant 1 : i32
    %c0_i32_21 = arith.constant 0 : i32
    %31 = tpu.memref_slice %arg9[%9, %c0_i32_21] : memref<512x16xbf16, #tpu.memory_space<any>> -> memref<16x16xbf16, #tpu.memory_space<any>>
    %c16_i32_22 = arith.constant 16 : i32
    %c0_i32_23 = arith.constant 0 : i32
    %32 = tpu.memref_slice %arg12[%c16_i32_22, %c0_i32_23] : memref<32x16xbf16, #tpu.memory_space<vmem>> -> memref<16x16xbf16, #tpu.memory_space<vmem>>
    %33 = tpu.memref_slice %arg13[%c1_i32_20] : memref<2x!tpu.dma_semaphore, #tpu.memory_space<semaphore_mem>> -> memref<1x!tpu.dma_semaphore, #tpu.memory_space<semaphore_mem>>
    %34 = tpu.memref_squeeze %33 : memref<1x!tpu.dma_semaphore, #tpu.memory_space<semaphore_mem>> -> memref<!tpu.dma_semaphore, #tpu.memory_space<semaphore_mem>>
    tpu.wait_dma2 semaphore(%34 : memref<!tpu.dma_semaphore, #tpu.memory_space<semaphore_mem>>) src(%31 : memref<16x16xbf16, #tpu.memory_space<any>>) dst(%32 : memref<16x16xbf16, #tpu.memory_space<vmem>>)
    %c0_24 = arith.constant 0 : index
    %c0_25 = arith.constant 0 : index
    %35 = vector.load %arg12[%c0_24, %c0_25] : memref<32x16xbf16, #tpu.memory_space<vmem>>, vector<32x16xbf16>
    %cst_26 = arith.constant dense<0.000000e+00> : vector<32x4xf32>
    %36 = tpu.matmul %35, %18, %cst_26 {dimension_numbers = #tpu.dot_dimension_numbers<[1], [0], [0], [1], [0, 0, 1, 1], [], []>} : vector<32x16xbf16>, vector<16x4xbf16>, vector<32x4xf32> -> vector<32x4xf32>
    %37 = vector.broadcast %19 : vector<1x4xf32> to vector<32x4xf32>
    %38 = arith.addf %36, %37 : vector<32x4xf32>
    %cst_27 = arith.constant 0.000000e+00 : f32
    %39 = vector.broadcast %cst_27 : f32 to vector<32x4xf32>
    %40 = arith.maximumf %38, %39 : vector<32x4xf32>
    %c0_i32_28 = arith.constant 0 : i32
    %41 = arith.cmpi sgt, %arg1, %c0_i32_28 : i32
    %42 = vector.extract_strided_slice %40 {offsets = [0, 0], sizes = [16, 4], strides = [1, 1]} : vector<32x4xf32> to vector<16x4xf32>
    %cst_29 = arith.constant 0.000000e+00 : f32
    %43 = vector.broadcast %cst_29 : f32 to vector<16x4xf32>
    %44 = arith.select %41, %42, %43 : vector<16x4xf32>
    %45 = arith.truncf %44 : vector<16x4xf32> to vector<16x4xbf16>
    %c3_i32 = arith.constant 3 : i32
    %46 = arith.cmpi slt, %arg1, %c3_i32 : i32
    %47 = vector.extract_strided_slice %40 {offsets = [16, 0], sizes = [16, 4], strides = [1, 1]} : vector<32x4xf32> to vector<16x4xf32>
    %cst_30 = arith.constant 0.000000e+00 : f32
    %48 = vector.broadcast %cst_30 : f32 to vector<16x4xf32>
    %49 = arith.select %46, %47, %48 : vector<16x4xf32>
    %50 = arith.truncf %49 : vector<16x4xf32> to vector<16x4xbf16>
    %c32 = arith.constant 32 : index
    %c0_31 = arith.constant 0 : index
    %51 = vector.load %arg11[%c32, %c0_31] : memref<128x12xbf16, #tpu.memory_space<vmem>>, vector<16x4xbf16>
    tpu.vector_store %arg11[%c32, %c0_31], %45 {strides = array<i32>} : memref<128x12xbf16, #tpu.memory_space<vmem>>, vector<16x4xbf16>,
    %c48 = arith.constant 48 : index
    %c0_32 = arith.constant 0 : index
    %52 = vector.load %arg11[%c48, %c0_32] : memref<128x12xbf16, #tpu.memory_space<vmem>>, vector<64x4xbf16>
    tpu.vector_store %arg11[%c48, %c0_32], %26 {strides = array<i32>} : memref<128x12xbf16, #tpu.memory_space<vmem>>, vector<64x4xbf16>,
    %c112 = arith.constant 112 : index
    %c0_33 = arith.constant 0 : index
    %53 = vector.load %arg11[%c112, %c0_33] : memref<128x12xbf16, #tpu.memory_space<vmem>>, vector<16x4xbf16>
    tpu.vector_store %arg11[%c112, %c0_33], %50 {strides = array<i32>} : memref<128x12xbf16, #tpu.memory_space<vmem>>, vector<16x4xbf16>,
    %c16 = arith.constant 16 : index
    %c4 = arith.constant 4 : index
    %54 = vector.load %arg11[%c16, %c4] : memref<128x12xbf16, #tpu.memory_space<vmem>>, vector<16x4xbf16>
    tpu.vector_store %arg11[%c16, %c4], %45 {strides = array<i32>} : memref<128x12xbf16, #tpu.memory_space<vmem>>, vector<16x4xbf16>,
    %c32_34 = arith.constant 32 : index
    %c4_35 = arith.constant 4 : index
    %55 = vector.load %arg11[%c32_34, %c4_35] : memref<128x12xbf16, #tpu.memory_space<vmem>>, vector<64x4xbf16>
    tpu.vector_store %arg11[%c32_34, %c4_35], %26 {strides = array<i32>} : memref<128x12xbf16, #tpu.memory_space<vmem>>, vector<64x4xbf16>,
    %c96 = arith.constant 96 : index
    %c4_36 = arith.constant 4 : index
    %56 = vector.load %arg11[%c96, %c4_36] : memref<128x12xbf16, #tpu.memory_space<vmem>>, vector<16x4xbf16>
    tpu.vector_store %arg11[%c96, %c4_36], %50 {strides = array<i32>} : memref<128x12xbf16, #tpu.memory_space<vmem>>, vector<16x4xbf16>,
    %c0_37 = arith.constant 0 : index
    %c8 = arith.constant 8 : index
    %57 = vector.load %arg11[%c0_37, %c8] : memref<128x12xbf16, #tpu.memory_space<vmem>>, vector<16x4xbf16>
    tpu.vector_store %arg11[%c0_37, %c8], %45 {strides = array<i32>} : memref<128x12xbf16, #tpu.memory_space<vmem>>, vector<16x4xbf16>,
    %c16_38 = arith.constant 16 : index
    %c8_39 = arith.constant 8 : index
    %58 = vector.load %arg11[%c16_38, %c8_39] : memref<128x12xbf16, #tpu.memory_space<vmem>>, vector<64x4xbf16>
    tpu.vector_store %arg11[%c16_38, %c8_39], %26 {strides = array<i32>} : memref<128x12xbf16, #tpu.memory_space<vmem>>, vector<64x4xbf16>,
    %c80 = arith.constant 80 : index
    %c8_40 = arith.constant 8 : index
    %59 = vector.load %arg11[%c80, %c8_40] : memref<128x12xbf16, #tpu.memory_space<vmem>>, vector<16x4xbf16>
    tpu.vector_store %arg11[%c80, %c8_40], %50 {strides = array<i32>} : memref<128x12xbf16, #tpu.memory_space<vmem>>, vector<16x4xbf16>,
    %60 = tpu.iota {dimensions = array<i32: 0>} : vector<64x1xi32>
    %c16_i32_41 = arith.constant 16 : i32
    %c0_i32_42 = arith.constant 0 : i32
    %61 = arith.cmpi eq, %c16_i32_41, %c0_i32_42 : i32
    %c1_i32_43 = arith.constant 1 : i32
    %62 = arith.select %61, %c1_i32_43, %c16_i32_41 : i32
    %63 = vector.broadcast %62 : i32 to vector<64x1xi32>
    %64 = arith.remsi %60, %63 : vector<64x1xi32>
    %c0_i32_44 = arith.constant 0 : i32
    %65 = vector.broadcast %c0_i32_44 : i32 to vector<64x1xi32>
    %66 = arith.cmpi ne, %64, %65 : vector<64x1xi32>
    %c0_i32_45 = arith.constant 0 : i32
    %67 = vector.broadcast %c0_i32_45 : i32 to vector<64x1xi32>
    %68 = arith.cmpi slt, %64, %67 : vector<64x1xi32>
    %c0_i32_46 = arith.constant 0 : i32
    %69 = arith.cmpi slt, %62, %c0_i32_46 : i32
    %70 = vector.broadcast %69 : i1 to vector<64x1xi1>
    %71 = vector.broadcast %70 : vector<64x1xi1> to vector<64x1xi1>
    %72 = arith.xori %68, %71 : vector<64x1xi1>
    %73 = arith.andi %72, %66 : vector<64x1xi1>
    %74 = vector.broadcast %62 : i32 to vector<64x1xi32>
    %75 = arith.addi %64, %74 : vector<64x1xi32>
    %76 = arith.select %73, %75, %64 : vector<64x1xi1>, vector<64x1xi32>
    %c0_i32_47 = arith.constant 0 : i32
    %77 = vector.broadcast %c0_i32_47 : i32 to vector<64x1xi32>
    %78 = arith.cmpi sgt, %76, %77 : vector<64x1xi32>
    %c15_i32_48 = arith.constant 15 : i32
    %79 = vector.broadcast %c15_i32_48 : i32 to vector<64x1xi32>
    %80 = arith.cmpi slt, %76, %79 : vector<64x1xi32>
    %cst_49 = arith.constant 0.000000e+00 : bf16
    %81 = vector.broadcast %cst_49 : bf16 to vector<64x12xbf16>
    %cst_50 = arith.constant 0.000000e+00 : f32
    %82 = vector.broadcast %cst_50 : f32 to vector<64x4xf32>
    %c31 = arith.constant 31 : index
    %c0_51 = arith.constant 0 : index
    %83 = vector.load %arg11[%c31, %c0_51] : memref<128x12xbf16, #tpu.memory_space<vmem>>, vector<64x12xbf16>
    %84 = vector.shape_cast %78 : vector<64x1xi1> to vector<64x1xi1>
    %85 = vector.broadcast %84 : vector<64x1xi1> to vector<64x12xi1>
    %86 = arith.select %85, %83, %81 : vector<64x12xi1>, vector<64x12xbf16>
    %c0_52 = arith.constant 0 : index
    %c0_53 = arith.constant 0 : index
    %c0_54 = arith.constant 0 : index
    %87 = vector.load %arg5[%c0_52, %c0_53, %c0_54] : memref<3x12x4xbf16, #tpu.memory_space<vmem>>, vector<1x12x4xbf16>
    %88 = vector.shape_cast %87 : vector<1x12x4xbf16> to vector<12x4xbf16>
    %cst_55 = arith.constant dense<0.000000e+00> : vector<64x4xf32>
    %89 = tpu.matmul %86, %88, %cst_55 {dimension_numbers = #tpu.dot_dimension_numbers<[1], [0], [0], [1], [0, 0, 1, 1], [], []>} : vector<64x12xbf16>, vector<12x4xbf16>, vector<64x4xf32> -> vector<64x4xf32>
    %90 = arith.addf %82, %89 : vector<64x4xf32>
    %c32_56 = arith.constant 32 : index
    %c0_57 = arith.constant 0 : index
    %91 = vector.load %arg11[%c32_56, %c0_57] : memref<128x12xbf16, #tpu.memory_space<vmem>>, vector<64x12xbf16>
    %c1 = arith.constant 1 : index
    %c0_58 = arith.constant 0 : index
    %c0_59 = arith.constant 0 : index
    %92 = vector.load %arg5[%c1, %c0_58, %c0_59] : memref<3x12x4xbf16, #tpu.memory_space<vmem>>, vector<1x12x4xbf16>
    %93 = vector.shape_cast %92 : vector<1x12x4xbf16> to vector<12x4xbf16>
    %cst_60 = arith.constant dense<0.000000e+00> : vector<64x4xf32>
    %94 = tpu.matmul %91, %93, %cst_60 {dimension_numbers = #tpu.dot_dimension_numbers<[1], [0], [0], [1], [0, 0, 1, 1], [], []>} : vector<64x12xbf16>, vector<12x4xbf16>, vector<64x4xf32> -> vector<64x4xf32>
    %95 = arith.addf %90, %94 : vector<64x4xf32>
    %c33 = arith.constant 33 : index
    %c0_61 = arith.constant 0 : index
    %96 = vector.load %arg11[%c33, %c0_61] : memref<128x12xbf16, #tpu.memory_space<vmem>>, vector<64x12xbf16>
    %97 = vector.shape_cast %80 : vector<64x1xi1> to vector<64x1xi1>
    %98 = vector.broadcast %97 : vector<64x1xi1> to vector<64x12xi1>
    %99 = arith.select %98, %96, %81 : vector<64x12xi1>, vector<64x12xbf16>
    %c2 = arith.constant 2 : index
    %c0_62 = arith.constant 0 : index
    %c0_63 = arith.constant 0 : index
    %100 = vector.load %arg5[%c2, %c0_62, %c0_63] : memref<3x12x4xbf16, #tpu.memory_space<vmem>>, vector<1x12x4xbf16>
    %101 = vector.shape_cast %100 : vector<1x12x4xbf16> to vector<12x4xbf16>
    %cst_64 = arith.constant dense<0.000000e+00> : vector<64x4xf32>
    %102 = tpu.matmul %99, %101, %cst_64 {dimension_numbers = #tpu.dot_dimension_numbers<[1], [0], [0], [1], [0, 0, 1, 1], [], []>} : vector<64x12xbf16>, vector<12x4xbf16>, vector<64x4xf32> -> vector<64x4xf32>
    %103 = arith.addf %95, %102 : vector<64x4xf32>
    %c0_65 = arith.constant 0 : index
    %c0_66 = arith.constant 0 : index
    %104 = vector.load %arg6[%c0_65, %c0_66] : memref<1x4xf32, #tpu.memory_space<vmem>>, vector<1x4xf32>
    %105 = vector.broadcast %104 : vector<1x4xf32> to vector<64x4xf32>
    %106 = arith.addf %103, %105 : vector<64x4xf32>
    %cst_67 = arith.constant 0.000000e+00 : f32
    %107 = vector.broadcast %cst_67 : f32 to vector<64x4xf32>
    %108 = arith.maximumf %106, %107 : vector<64x4xf32>
    %109 = arith.truncf %108 : vector<64x4xf32> to vector<64x4xbf16>
    %c0_68 = arith.constant 0 : index
    %c0_69 = arith.constant 0 : index
    %110 = vector.load %arg7[%c0_68, %c0_69] : memref<4x16xbf16, #tpu.memory_space<vmem>>, vector<4x16xbf16>
    %cst_70 = arith.constant dense<0.000000e+00> : vector<64x16xf32>
    %111 = tpu.matmul %109, %110, %cst_70 {dimension_numbers = #tpu.dot_dimension_numbers<[1], [0], [0], [1], [0, 0, 1, 1], [], []>} : vector<64x4xbf16>, vector<4x16xbf16>, vector<64x16xf32> -> vector<64x16xf32>
    %c0_71 = arith.constant 0 : index
    %c0_72 = arith.constant 0 : index
    %112 = vector.load %arg8[%c0_71, %c0_72] : memref<1x16xf32, #tpu.memory_space<vmem>>, vector<1x16xf32>
    %113 = vector.broadcast %112 : vector<1x16xf32> to vector<64x16xf32>
    %114 = arith.addf %111, %113 : vector<64x16xf32>
    %cst_73 = arith.constant 0.000000e+00 : f32
    %115 = vector.broadcast %cst_73 : f32 to vector<64x16xf32>
    %116 = arith.maximumf %114, %115 : vector<64x16xf32>
    %c0_74 = arith.constant 0 : index
    %c0_75 = arith.constant 0 : index
    %117 = vector.load %arg2[%c0_74, %c0_75] : memref<64x16xbf16, #tpu.memory_space<vmem>>, vector<64x16xbf16>
    %118 = arith.extf %117 : vector<64x16xbf16> to vector<64x16xf32>
    %119 = arith.addf %116, %118 : vector<64x16xf32>
    %cst_76 = arith.constant 0.000000e+00 : f32
    %120 = vector.broadcast %cst_76 : f32 to vector<64x16xf32>
    %121 = arith.maximumf %119, %120 : vector<64x16xf32>
    %122 = arith.truncf %121 : vector<64x16xf32> to vector<64x16xbf16>
    %c0_77 = arith.constant 0 : index
    %c0_78 = arith.constant 0 : index
    %123 = vector.load %arg10[%c0_77, %c0_78] : memref<64x16xbf16, #tpu.memory_space<vmem>>, vector<64x16xbf16>
    tpu.vector_store %arg10[%c0_77, %c0_78], %122 {strides = array<i32>} : memref<64x16xbf16, #tpu.memory_space<vmem>>, vector<64x16xbf16>,
    return
  }
  func.func @transform_0(%arg0: i32, %arg1: i32) -> (i32, i32) {
    %c4_i32 = arith.constant 4 : i32
    %0 = arith.muli %arg0, %c4_i32 : i32
    %1 = arith.addi %0, %arg1 : i32
    %c0_i32 = arith.constant 0 : i32
    %c0_i32_0 = arith.constant 0 : i32
    return %1, %c0_i32 : i32, i32
  }
  func.func @transform_1(%arg0: i32, %arg1: i32) -> (i32, i32) {
    %c0_i32 = arith.constant 0 : i32
    %c0_i32_0 = arith.constant 0 : i32
    %c0_i32_1 = arith.constant 0 : i32
    return %c0_i32, %c0_i32_0 : i32, i32
  }
  func.func @transform_2(%arg0: i32, %arg1: i32) -> (i32, i32) {
    %c0_i32 = arith.constant 0 : i32
    %c0_i32_0 = arith.constant 0 : i32
    %c0_i32_1 = arith.constant 0 : i32
    return %c0_i32, %c0_i32_0 : i32, i32
  }
  func.func @transform_3(%arg0: i32, %arg1: i32) -> (i32, i32, i32) {
    %c0_i32 = arith.constant 0 : i32
    %c0_i32_0 = arith.constant 0 : i32
    %c0_i32_1 = arith.constant 0 : i32
    %c0_i32_2 = arith.constant 0 : i32
    return %c0_i32, %c0_i32_0, %c0_i32_1 : i32, i32, i32
  }
  func.func @transform_4(%arg0: i32, %arg1: i32) -> (i32, i32) {
    %c0_i32 = arith.constant 0 : i32
    %c0_i32_0 = arith.constant 0 : i32
    %c0_i32_1 = arith.constant 0 : i32
    return %c0_i32, %c0_i32_0 : i32, i32
  }
  func.func @transform_5(%arg0: i32, %arg1: i32) -> (i32, i32) {
    %c0_i32 = arith.constant 0 : i32
    %c0_i32_0 = arith.constant 0 : i32
    %c0_i32_1 = arith.constant 0 : i32
    return %c0_i32, %c0_i32_0 : i32, i32
  }
  func.func @transform_6(%arg0: i32, %arg1: i32) -> (i32, i32) {
    %c0_i32 = arith.constant 0 : i32
    %c0_i32_0 = arith.constant 0 : i32
    %c0_i32_1 = arith.constant 0 : i32
    return %c0_i32, %c0_i32_0 : i32, i32
  }
  func.func @transform_8(%arg0: i32, %arg1: i32) -> (i32, i32) {
    %c4_i32 = arith.constant 4 : i32
    %0 = arith.muli %arg0, %c4_i32 : i32
    %1 = arith.addi %0, %arg1 : i32
    %c0_i32 = arith.constant 0 : i32
    %c0_i32_0 = arith.constant 0 : i32
    return %1, %c0_i32 : i32, i32
  }
}

</mosaic_0001>

<llo_original>
// kernel: bottleneck_forward.1
$region0: #{bottleneck_forward.1}
  #allocation0 [shape = 'u32[]', space=smem, size = 0x4, offset = 0x4, fixed_abs, tag = 'smem constant byte address 0x4 - core index']
  #allocation1 [shape = 'u32[72,128]{1,0:T(1,128)}', space=vmem, size = 0x9000, scoped, tag = 'internal scratch']
  #allocation2 [shape = 'bf16[128,12]{1,0:T(8,128)(2,1)}', space=vmem, size = 0x8000, scoped, tag = 'scratch operand']
  #allocation3 [shape = 'bf16[32,16]{1,0:T(8,128)(2,1)}', space=vmem, size = 0x2000, scoped, tag = 'scratch operand']
  #allocation4 [shape = 's32[2]{0}', space=sflag, size = 0x8, scoped, tag = 'scratch operand']
  #allocation5 [shape = 's32[]', space=sflag, size = 0x4, offset = 0, fixed_abs, tag = 'sflag constant byte address 0x0 - dummy sync flag']
  #allocation6 [shape = 's32[]', space=sflag, size = 0x4, offset = 0, fixed_abs, tag = 'sflag constant byte address 0x0 - dummy sync flag']
  %s0 = inlined_call_operand.vmem [shape: bf16[512,16], index: 0, kind: input, shape index: {}, may-alias: {0,7}]
  %s1 = inlined_call_operand.vmem [shape: bf16[16,4], index: 1, kind: input, shape index: {}]
  %s2 = inlined_call_operand.vmem [shape: f32[1,4], index: 2, kind: input, shape index: {}]
  %s3 = inlined_call_operand.vmem [shape: bf16[3,12,4], index: 3, kind: input, shape index: {}]
  %s4 = inlined_call_operand.vmem [shape: f32[1,4], index: 4, kind: input, shape index: {}]
  %s5 = inlined_call_operand.vmem [shape: bf16[4,16], index: 5, kind: input, shape index: {}]
  %s6 = inlined_call_operand.vmem [shape: f32[1,16], index: 6, kind: input, shape index: {}]
  %s7 = inlined_call_operand.vmem [shape: bf16[512,16], index: 7, kind: input, shape index: {}, may-alias: {0,7}]
  %s8 = inlined_call_operand.vmem [shape: bf16[512,16], index: 8, kind: output, shape index: {}]
  %s9 = sld [smem:[#allocation0]]
  $region129: #{bottleneck_forward.1} parent=0
    _
  %s11 = ssub.s32 1, %s9
  %s12 = scalar_select 0, %s11, %s9
  loop: start=0, step=1, limit=10
  $region2: #{bottleneck_forward.1} parent=0 // loop_pre_header
    _
  $region3: #{bottleneck_forward.1} parent=0 // loop_header
    %s14 = sphi 0, %s18
    %p15 = scmp.ge.s32.totalorder %s14, 10
    %s21 = sphi 0, %s33
    %s22 = sphi 0, %s29
    %s23 = sphi 0, %s21
    %s24 = sphi 0, %s22
    %s25 = sphi 0, %s23
    %s26 = sphi 0, %s24
    %s40 = sphi 0, %s42
    %s43 = sphi 0, %s40
    %s44 = sphi 0, %s43
    %s60 = sphi 0, %s44
    %s64 = sphi 0, %s64
    %s66 = sphi 0, %s64
    %s67 = sphi 0, %s66
    %s81 = sphi 0, %s67
    %s85 = sphi 0, %s85
    %s87 = sphi 0, %s85
    %s88 = sphi 0, %s87
    %s102 = sphi 0, %s88
    %s106 = sphi 0, %s106
    %s108 = sphi 0, %s106
    %s109 = sphi 0, %s108
    %s123 = sphi 0, %s109
    %s127 = sphi 0, %s127
    %s129 = sphi 0, %s127
    %s130 = sphi 0, %s129
    %s144 = sphi 0, %s130
    %s148 = sphi 0, %s148
    %s150 = sphi 0, %s148
    %s151 = sphi 0, %s150
    %s165 = sphi 0, %s151
    %s169 = sphi 0, %s169
    %s171 = sphi 0, %s169
    %s172 = sphi 0, %s171
    %s186 = sphi 0, %s172
    %s196 = sphi 0, %s198
    %s199 = sphi 0, %s196
    %s200 = sphi 0, %s199
    %s216 = sphi 0, %s200
  $region4: #{bottleneck_forward.1} parent=0 // loop_header_branch
    %17 = sbr.rel (%p15) target = $region8
  $region5: #{bottleneck_forward.1} parent=0 // loop_body
    %s19 = ssub.s32 %s14, 1
    %s20 = ssub.s32 %s14, 2
    %s27 = sadd.s32 1, %s22
    %p28 = scmp.ge.s32.totalorder %s27, 4
    %s29 = scalar_select %p28, 0, %s27
    %s30 = sadd.s32 1, %s21
    %s31 = scalar_select %p28, %s30, %s21
    %p32 = scmp.ge.s32.totalorder %s31, 2
    %s33 = scalar_select %p32, 0, %s31
    %s34 = smul.u32 %s21, 4
    %s35 = sadd.s32 %s34, %s22
    %s36 = smul.u32 %s33, 4
    %s37 = sadd.s32 %s36, %s29
    %s38 = ssub.s32 %s35, %s37
    %p39 = scmp.eq.s32.totalorder %s38, 0
    %s41 = sadd.s32 %s40, 1
    %s42 = scalar_select %p39, %s40, %s41
    %p45 = pneg %p39
    %p46 = scmp.eq.s32.totalorder %s14, 7
    %p47 = por %p45, %p46
    %p48 = scmp.ne.s32.totalorder %s40, %s43
    %p49 = scmp.eq.s32.totalorder %s14, 0
    %p50 = por %p48, %p49
    %p51 = scmp.ne.s32.totalorder %s40, %s43
    %p52 = scmp.eq.s32.totalorder %s19, 7
    %p53 = por %p51, %p52
    %p54 = scmp.ne.s32.totalorder %s43, %s44
    %p55 = scmp.eq.s32.totalorder %s19, 0
    %p56 = por %p54, %p55
    %p57 = scmp.ne.s32.totalorder %s43, %s44
    %p58 = scmp.eq.s32.totalorder %s20, 7
    %p59 = por %p57, %p58
    %p61 = scmp.ne.s32.totalorder %s44, %s60
    %p62 = scmp.eq.s32.totalorder %s20, 0
    %p63 = por %p61, %p62
    %s65 = sadd.s32 %s64, 1
    %p68 = scmp.eq.s32.totalorder %s14, 7
    %p69 = scmp.ne.s32.totalorder %s64, %s66
    %p70 = scmp.eq.s32.totalorder %s14, 0
    %p71 = por %p69, %p70
    %p72 = scmp.ne.s32.totalorder %s64, %s66
    %p73 = scmp.eq.s32.totalorder %s19, 7
    %p74 = por %p72, %p73
    %p75 = scmp.ne.s32.totalorder %s66, %s67
    %p76 = scmp.eq.s32.totalorder %s19, 0
    %p77 = por %p75, %p76
    %p78 = scmp.ne.s32.totalorder %s66, %s67
    %p79 = scmp.eq.s32.totalorder %s20, 7
    %p80 = por %p78, %p79
    %p82 = scmp.ne.s32.totalorder %s67, %s81
    %p83 = scmp.eq.s32.totalorder %s20, 0
    %p84 = por %p82, %p83
    %s86 = sadd.s32 %s85, 1
    %p89 = scmp.eq.s32.totalorder %s14, 7
    %p90 = scmp.ne.s32.totalorder %s85, %s87
    %p91 = scmp.eq.s32.totalorder %s14, 0
    %p92 = por %p90, %p91
    %p93 = scmp.ne.s32.totalorder %s85, %s87
    %p94 = scmp.eq.s32.totalorder %s19, 7
    %p95 = por %p93, %p94
    %p96 = scmp.ne.s32.totalorder %s87, %s88
    %p97 = scmp.eq.s32.totalorder %s19, 0
    %p98 = por %p96, %p97
    %p99 = scmp.ne.s32.totalorder %s87, %s88
    %p100 = scmp.eq.s32.totalorder %s20, 7
    %p101 = por %p99, %p100
    %p103 = scmp.ne.s32.totalorder %s88, %s102
    %p104 = scmp.eq.s32.totalorder %s20, 0
    %p105 = por %p103, %p104
    %s107 = sadd.s32 %s106, 1
    %p110 = scmp.eq.s32.totalorder %s14, 7
    %p111 = scmp.ne.s32.totalorder %s106, %s108
    %p112 = scmp.eq.s32.totalorder %s14, 0
    %p113 = por %p111, %p112
    %p114 = scmp.ne.s32.totalorder %s106, %s108
    %p115 = scmp.eq.s32.totalorder %s19, 7
    %p116 = por %p114, %p115
    %p117 = scmp.ne.s32.totalorder %s108, %s109
    %p118 = scmp.eq.s32.totalorder %s19, 0
    %p119 = por %p117, %p118
    %p120 = scmp.ne.s32.totalorder %s108, %s109
    %p121 = scmp.eq.s32.totalorder %s20, 7
    %p122 = por %p120, %p121
    %p124 = scmp.ne.s32.totalorder %s109, %s123
    %p125 = scmp.eq.s32.totalorder %s20, 0
    %p126 = por %p124, %p125
    %s128 = sadd.s32 %s127, 1
    %p131 = scmp.eq.s32.totalorder %s14, 7
    %p132 = scmp.ne.s32.totalorder %s127, %s129
    %p133 = scmp.eq.s32.totalorder %s14, 0
    %p134 = por %p132, %p133
    %p135 = scmp.ne.s32.totalorder %s127, %s129
    %p136 = scmp.eq.s32.totalorder %s19, 7
    %p137 = por %p135, %p136
    %p138 = scmp.ne.s32.totalorder %s129, %s130
    %p139 = scmp.eq.s32.totalorder %s19, 0
    %p140 = por %p138, %p139
    %p141 = scmp.ne.s32.totalorder %s129, %s130
    %p142 = scmp.eq.s32.totalorder %s20, 7
    %p143 = por %p141, %p142
    %p145 = scmp.ne.s32.totalorder %s130, %s144
    %p146 = scmp.eq.s32.totalorder %s20, 0
    %p147 = por %p145, %p146
    %s149 = sadd.s32 %s148, 1
    %p152 = scmp.eq.s32.totalorder %s14, 7
    %p153 = scmp.ne.s32.totalorder %s148, %s150
    %p154 = scmp.eq.s32.totalorder %s14, 0
    %p155 = por %p153, %p154
    %p156 = scmp.ne.s32.totalorder %s148, %s150
    %p157 = scmp.eq.s32.totalorder %s19, 7
    %p158 = por %p156, %p157
    %p159 = scmp.ne.s32.totalorder %s150, %s151
    %p160 = scmp.eq.s32.totalorder %s19, 0
    %p161 = por %p159, %p160
    %p162 = scmp.ne.s32.totalorder %s150, %s151
    %p163 = scmp.eq.s32.totalorder %s20, 7
    %p164 = por %p162, %p163
    %p166 = scmp.ne.s32.totalorder %s151, %s165
    %p167 = scmp.eq.s32.totalorder %s20, 0
    %p168 = por %p166, %p167
    %s170 = sadd.s32 %s169, 1
    %p173 = scmp.eq.s32.totalorder %s14, 7
    %p174 = scmp.ne.s32.totalorder %s169, %s171
    %p175 = scmp.eq.s32.totalorder %s14, 0
    %p176 = por %p174, %p175
    %p177 = scmp.ne.s32.totalorder %s169, %s171
    %p178 = scmp.eq.s32.totalorder %s19, 7
    %p179 = por %p177, %p178
    %p180 = scmp.ne.s32.totalorder %s171, %s172
    %p181 = scmp.eq.s32.totalorder %s19, 0
    %p182 = por %p180, %p181
    %p183 = scmp.ne.s32.totalorder %s171, %s172
    %p184 = scmp.eq.s32.totalorder %s20, 7
    %p185 = por %p183, %p184
    %p187 = scmp.ne.s32.totalorder %s172, %s186
    %p188 = scmp.eq.s32.totalorder %s20, 0
    %p189 = por %p187, %p188
    %s190 = smul.u32 %s21, 4
    %s191 = sadd.s32 %s190, %s22
    %s192 = smul.u32 %s33, 4
    %s193 = sadd.s32 %s192, %s29
    %s194 = ssub.s32 %s191, %s193
    %p195 = scmp.eq.s32.totalorder %s194, 0
    %s197 = sadd.s32 %s196, 1
    %s198 = scalar_select %p195, %s196, %s197
    %p201 = pneg %p195
    %p202 = scmp.eq.s32.totalorder %s14, 7
    %p203 = por %p201, %p202
    %p204 = scmp.ne.s32.totalorder %s196, %s199
    %p205 = scmp.eq.s32.totalorder %s14, 0
    %p206 = por %p204, %p205
    %p207 = scmp.ne.s32.totalorder %s196, %s199
    %p208 = scmp.eq.s32.totalorder %s19, 7
    %p209 = por %p207, %p208
    %p210 = scmp.ne.s32.totalorder %s199, %s200
    %p211 = scmp.eq.s32.totalorder %s19, 0
    %p212 = por %p210, %p211
    %p213 = scmp.ne.s32.totalorder %s199, %s200
    %p214 = scmp.eq.s32.totalorder %s20, 7
    %p215 = por %p213, %p214
    %p217 = scmp.ne.s32.totalorder %s200, %s216
    %p218 = scmp.eq.s32.totalorder %s20, 0
    %p219 = por %p217, %p218
    %p220 = scmp.le.s32.totalorder 1, %s14
    %p221 = scmp.lt.s32.totalorder %s14, 9
    %p222 = pnand %p220, %p221
    %p223 = pneg %p222
    // Predicated region
    $region9: #{bottleneck_forward.1} parent=5 // pred_check
      _
    $region10: #{bottleneck_forward.1} parent=5 // pred_check_branch
      %225 = sbr.rel (%p222) target = $region12
    $region11: #{bottleneck_forward.1} parent=5 // pred_region
      %s226 = ssub.s32 %s14, 1
      // Predicated region
      $region13: #{bottleneck_forward.1} parent=11 // pred_check
        %p227 = pneg %p77
      $region14: #{bottleneck_forward.1} parent=11 // pred_check_branch
        %229 = sbr.rel (%p227) target = $region16
      $region15: #{bottleneck_forward.1} parent=11 // pred_region
        _
      $region16: #{bottleneck_forward.1} parent=11 // pred_fallthru
        _
      // Predicated region
      $region17: #{bottleneck_forward.1} parent=11 // pred_check
        %p230 = pneg %p98
      $region18: #{bottleneck_forward.1} parent=11 // pred_check_branch
        %232 = sbr.rel (%p230) target = $region20
      $region19: #{bottleneck_forward.1} parent=11 // pred_region
        _
      $region20: #{bottleneck_forward.1} parent=11 // pred_fallthru
        _
      // Predicated region
      $region21: #{bottleneck_forward.1} parent=11 // pred_check
        %p233 = pneg %p119
      $region22: #{bottleneck_forward.1} parent=11 // pred_check_branch
        %235 = sbr.rel (%p233) target = $region24
      $region23: #{bottleneck_forward.1} parent=11 // pred_region
        _
      $region24: #{bottleneck_forward.1} parent=11 // pred_fallthru
        _
      // Predicated region
      $region25: #{bottleneck_forward.1} parent=11 // pred_check
        %p236 = pneg %p140
      $region26: #{bottleneck_forward.1} parent=11 // pred_check_branch
        %238 = sbr.rel (%p236) target = $region28
      $region27: #{bottleneck_forward.1} parent=11 // pred_region
        _
      $region28: #{bottleneck_forward.1} parent=11 // pred_fallthru
        _
      // Predicated region
      $region29: #{bottleneck_forward.1} parent=11 // pred_check
        %p239 = pneg %p161
      $region30: #{bottleneck_forward.1} parent=11 // pred_check_branch
        %241 = sbr.rel (%p239) target = $region32
      $region31: #{bottleneck_forward.1} parent=11 // pred_region
        _
      $region32: #{bottleneck_forward.1} parent=11 // pred_fallthru
        _
      // Predicated region
      $region33: #{bottleneck_forward.1} parent=11 // pred_check
        %p242 = pneg %p182
      $region34: #{bottleneck_forward.1} parent=11 // pred_check_branch
        %244 = sbr.rel (%p242) target = $region36
      $region35: #{bottleneck_forward.1} parent=11 // pred_region
        _
      $region36: #{bottleneck_forward.1} parent=11 // pred_fallthru
        _
    $region12: #{bottleneck_forward.1} parent=5 // pred_fallthru
      _
    %p245 = scmp.lt.s32.totalorder %s14, 8
    // Predicated region
    $region37: #{bottleneck_forward.1} parent=5 // pred_check
      %p246 = pneg %p245
    $region38: #{bottleneck_forward.1} parent=5 // pred_check_branch
      %248 = sbr.rel (%p246) target = $region40
    $region39: #{bottleneck_forward.1} parent=5 // pred_region
      // Predicated region
      $region41: #{bottleneck_forward.1} parent=39 // pred_check
        %p249 = pneg %p50
      $region42: #{bottleneck_forward.1} parent=39 // pred_check_branch
        %251 = sbr.rel (%p249) target = $region44
      $region43: #{bottleneck_forward.1} parent=39 // pred_region
        %s252 = smul.u32 %s21, 4
        %s253 = sadd.s32 %s252, %s22
        %s254 = smul.u32 8, %s253
        %p255 = scmp.lt.s32.totalorder %s254, 63
        %s256 = scalar_select %p255, %s254, 63
        %s257 = smul.addr %s256, 4
        %s258 = scalar_lea.vmem %s0, %s257
        %s259 = smul.u32 %s21, 4
        %s260 = sadd.s32 %s259, %s22
        %s261 = smul.u32 8, %s260
      $region44: #{bottleneck_forward.1} parent=39 // pred_fallthru
        _
    $region40: #{bottleneck_forward.1} parent=5 // pred_fallthru
      _
    %p262 = scmp.le.s32.totalorder 1, %s14
    %p263 = scmp.lt.s32.totalorder %s14, 9
    %p264 = pnand %p262, %p263
    %p265 = pneg %p264
    // Predicated region
    $region45: #{bottleneck_forward.1} parent=5 // pred_check
      _
    $region46: #{bottleneck_forward.1} parent=5 // pred_check_branch
      %267 = sbr.rel (%p264) target = $region48
    $region47: #{bottleneck_forward.1} parent=5 // pred_region
      %s268 = ssub.s32 %s14, 1
      %s269 = smul.u32 %s23, 4
      %s270 = sadd.s32 %s269, %s24
      %s271 = smul.u32 8, %s270
      %p272 = scmp.lt.s32.totalorder %s271, 63
      %s273 = scalar_select %p272, %s271, 63
      %s274 = smul.addr %s273, 4
      %s275 = scalar_lea.vmem %s0, %s274
      %p276 = pneg %p56
      %p277 = pneg %p53
      %p278 = pneg %p77
      %p279 = pneg %p74
      %p280 = pneg %p98
      %p281 = pneg %p95
      %p282 = pneg %p119
      %p283 = pneg %p116
      %p284 = pneg %p140
      %p285 = pneg %p137
      %p286 = pneg %p161
      %p287 = pneg %p158
      %p288 = pneg %p182
      %p289 = pneg %p179
      %p290 = pneg %p212
      %p291 = pneg %p209
      %s292 = smul.u32 %s23, 4
      %s293 = sadd.s32 %s292, %s24
      %s294 = smul.u32 8, %s293
      %p295 = scmp.lt.s32.totalorder %s294, 63
      %s296 = scalar_select %p295, %s294, 63
      %s297 = smul.addr %s296, 4
      %s298 = scalar_lea.vmem %s8, %s297
      %s299 = smul.u32 %s23, 4
      %s300 = sadd.s32 %s299, %s24
      %s301 = smul.u32 8, %s300
      %p302 = scmp.lt.s32.totalorder %s301, 63
      %s303 = scalar_select %p302, %s301, 63
      %s304 = smul.addr %s303, 4
      %s305 = scalar_lea.vmem %s0, %s304
      %s306 = smul.u32 %s23, 4
      %s307 = sadd.s32 %s306, %s24
      %s308 = smul.u32 8, %s307
      %s309 = smul.u32 %s23, 4
      %s310 = sadd.s32 %s309, %s24
      %s311 = smul.u32 8, %s310
      %p312 = scmp.lt.s32.totalorder %s311, 63
      %s313 = scalar_select %p312, %s311, 63
      %s314 = smul.addr %s313, 4
      %s315 = scalar_lea.vmem %s8, %s314
      %s316 = smul.u32 %s23, 4
      %s317 = sadd.s32 %s316, %s24
      %s318 = smul.u32 8, %s317
      %s322 = smul.u32 %s24, 4
      %s323 = ssub.s32 %s322, 1
      %p324 = scmp.gt.s32.totalorder %s323, 0
      %s325 = scalar_select %p324, %s323, 0
      %s326 = sadd.s32 %s322, 4
      %p327 = scmp.lt.s32.totalorder %s326, 15
      %s328 = scalar_select %p327, %s326, 15
      %s329 = smul.u32 %s23, 256
      %s330 = smul.u32 %s325, 16
      %s331 = sadd.s32 %s329, %s330
      %s332 = smul.u32 %s328, 16
      %s333 = sadd.s32 %s329, %s332
      %s334 = sshra.s32 %s331, 3
      %s335 = sand.u32 %s331, 7
      %s336 = smul.addr %s334, 4
      %s337 = scalar_lea.vmem %s7, %s336
      // Predicated region
      $region49: #{bottleneck_forward.1} parent=47 // pred_check
        _
      $region50: #{bottleneck_forward.1} parent=47 // pred_check_branch
        %339 = sbr.rel (0) target = $region52
      $region51: #{bottleneck_forward.1} parent=47 // pred_region
        // Predicated region
        $region64: #{bottleneck_forward.1} parent=51 // pred_check
          _
        $region65: #{bottleneck_forward.1} parent=51 // pred_check_branch
          %355 = sbr.rel (0) target = $region67
        $region66: #{bottleneck_forward.1} parent=51 // pred_region
          loop: start=0, step=1, limit=1
          $region68: #{bottleneck_forward.1} parent=66 // loop_pre_header
            _
          $region69: #{bottleneck_forward.1} parent=66 // loop_header
            %s357 = sphi 0, %s361
            %p358 = scmp.ge.s32.totalorder %s357, 1
            %s362 = sphi %s337, %s337
            %s363 = sphi [#allocation3], [#allocation3]
          $region70: #{bottleneck_forward.1} parent=66 // loop_header_branch
            %360 = sbr.rel (%p358) target = $region74
          $region71: #{bottleneck_forward.1} parent=66 // loop_body
            %v364 = vld [vmem:[%s362] sm:$0xff]
            %365 = vst [vmem:[%s363] sm:$0xff] %v364
          $region72: #{bottleneck_forward.1} parent=66 // loop_footer
            %s361 = sadd.s32 1, %s357
          $region73: #{bottleneck_forward.1} parent=66 // loop_footer_branch
            %356 = sbr.rel target = $region69
          $region74: #{bottleneck_forward.1} parent=66 // loop_exit
            _
        $region67: #{bottleneck_forward.1} parent=51 // pred_fallthru
          _
        // Predicated region
        $region75: #{bottleneck_forward.1} parent=51 // pred_check
          _
        $region76: #{bottleneck_forward.1} parent=51 // pred_check_branch
          %367 = sbr.rel target = $region78
        $region77: #{bottleneck_forward.1} parent=51 // pred_region
          _
        $region78: #{bottleneck_forward.1} parent=51 // pred_fallthru
          _
      $region52: #{bottleneck_forward.1} parent=47 // pred_fallthru
        _
      // Predicated region
      $region53: #{bottleneck_forward.1} parent=47 // pred_check
        _
      $region54: #{bottleneck_forward.1} parent=47 // pred_check_branch
        %341 = sbr.rel target = $region56
      $region55: #{bottleneck_forward.1} parent=47 // pred_region
        %s343 = ssub.s32 256, 1
        loop: start=0, step=1, limit=1
        $region57: #{bottleneck_forward.1} parent=55 // loop_pre_header
          _
        $region58: #{bottleneck_forward.1} parent=55 // loop_header
          %s345 = sphi 0, %s349
          %p346 = scmp.ge.s32.totalorder %s345, 1
          %s350 = sphi %s337, %s337
          %s351 = sphi [#allocation3], [#allocation3]
        $region59: #{bottleneck_forward.1} parent=55 // loop_header_branch
          %348 = sbr.rel (%p346) target = $region63
        $region60: #{bottleneck_forward.1} parent=55 // loop_body
          %v352 = vld [vmem:[%s350] sm:%s343]
          %353 = vst [vmem:[%s351] sm:%s343] %v352
        $region61: #{bottleneck_forward.1} parent=55 // loop_footer
          %s349 = sadd.s32 1, %s345
        $region62: #{bottleneck_forward.1} parent=55 // loop_footer_branch
          %344 = sbr.rel target = $region58
        $region63: #{bottleneck_forward.1} parent=55 // loop_exit
          _
      $region56: #{bottleneck_forward.1} parent=47 // pred_fallthru
        _
      // Predicated region
      $region79: #{bottleneck_forward.1} parent=47 // pred_check
        _
      $region80: #{bottleneck_forward.1} parent=47 // pred_check_branch
        %370 = sbr.rel (0) target = $region82
      $region81: #{bottleneck_forward.1} parent=47 // pred_region
        %371 = vsyncadd [#allocation4], 128
      $region82: #{bottleneck_forward.1} parent=47 // pred_fallthru
        _
      %s372 = sshra.s32 %s333, 3
      %s373 = sand.u32 %s333, 7
      %s374 = smul.addr %s372, 4
      %s375 = scalar_lea.vmem %s7, %s374
      %s376 = scalar_lea.vmem [#allocation3], 8
      %s377 = scalar_lea.sflag [#allocation4], 1
      // Predicated region
      $region83: #{bottleneck_forward.1} parent=47 // pred_check
        _
      $region84: #{bottleneck_forward.1} parent=47 // pred_check_branch
        %379 = sbr.rel (0) target = $region86
      $region85: #{bottleneck_forward.1} parent=47 // pred_region
        // Predicated region
        $region98: #{bottleneck_forward.1} parent=85 // pred_check
          _
        $region99: #{bottleneck_forward.1} parent=85 // pred_check_branch
          %395 = sbr.rel (0) target = $region101
        $region100: #{bottleneck_forward.1} parent=85 // pred_region
          loop: start=0, step=1, limit=1
          $region102: #{bottleneck_forward.1} parent=100 // loop_pre_header
            _
          $region103: #{bottleneck_forward.1} parent=100 // loop_header
            %s397 = sphi 0, %s401
            %p398 = scmp.ge.s32.totalorder %s397, 1
            %s402 = sphi %s375, %s375
            %s403 = sphi %s376, %s376
          $region104: #{bottleneck_forward.1} parent=100 // loop_header_branch
            %400 = sbr.rel (%p398) target = $region108
          $region105: #{bottleneck_forward.1} parent=100 // loop_body
            %v404 = vld [vmem:[%s402] sm:$0xff]
            %405 = vst [vmem:[%s403] sm:$0xff] %v404
          $region106: #{bottleneck_forward.1} parent=100 // loop_footer
            %s401 = sadd.s32 1, %s397
          $region107: #{bottleneck_forward.1} parent=100 // loop_footer_branch
            %396 = sbr.rel target = $region103
          $region108: #{bottleneck_forward.1} parent=100 // loop_exit
            _
        $region101: #{bottleneck_forward.1} parent=85 // pred_fallthru
          _
        // Predicated region
        $region109: #{bottleneck_forward.1} parent=85 // pred_check
          _
        $region110: #{bottleneck_forward.1} parent=85 // pred_check_branch
          %407 = sbr.rel target = $region112
        $region111: #{bottleneck_forward.1} parent=85 // pred_region
          _
        $region112: #{bottleneck_forward.1} parent=85 // pred_fallthru
          _
      $region86: #{bottleneck_forward.1} parent=47 // pred_fallthru
        _
      // Predicated region
      $region87: #{bottleneck_forward.1} parent=47 // pred_check
        _
      $region88: #{bottleneck_forward.1} parent=47 // pred_check_branch
        %381 = sbr.rel target = $region90
      $region89: #{bottleneck_forward.1} parent=47 // pred_region
        %s383 = ssub.s32 256, 1
        loop: start=0, step=1, limit=1
        $region91: #{bottleneck_forward.1} parent=89 // loop_pre_header
          _
        $region92: #{bottleneck_forward.1} parent=89 // loop_header
          %s385 = sphi 0, %s389
          %p386 = scmp.ge.s32.totalorder %s385, 1
          %s390 = sphi %s375, %s375
          %s391 = sphi %s376, %s376
        $region93: #{bottleneck_forward.1} parent=89 // loop_header_branch
          %388 = sbr.rel (%p386) target = $region97
        $region94: #{bottleneck_forward.1} parent=89 // loop_body
          %v392 = vld [vmem:[%s390] sm:%s383]
          %393 = vst [vmem:[%s391] sm:%s383] %v392
        $region95: #{bottleneck_forward.1} parent=89 // loop_footer
          %s389 = sadd.s32 1, %s385
        $region96: #{bottleneck_forward.1} parent=89 // loop_footer_branch
          %384 = sbr.rel target = $region92
        $region97: #{bottleneck_forward.1} parent=89 // loop_exit
          _
      $region90: #{bottleneck_forward.1} parent=47 // pred_fallthru
        _
      // Predicated region
      $region113: #{bottleneck_forward.1} parent=47 // pred_check
        _
      $region114: #{bottleneck_forward.1} parent=47 // pred_check_branch
        %410 = sbr.rel (0) target = $region116
      $region115: #{bottleneck_forward.1} parent=47 // pred_region
        %411 = vsyncadd %s377, 128
      $region116: #{bottleneck_forward.1} parent=47 // pred_fallthru
        _
      %v412 = vld [vmem:[%s1] sm:$0xf]
      %v413 = vld [vmem:[%s1 + $0x4] sm:$0xf]
      %v414 = vld [vmem:[%s2] sm:$0x1]
      %v415 = vld [vmem:[%s305] sm:$0xf]
      %v416 = vld [vmem:[%s305 + $0x4] sm:$0xf]
      %v417 = vld [vmem:[%s305 + $0x8] sm:$0xf]
      %v418 = vld [vmem:[%s305 + $0xc] sm:$0xf]
      %v419 = vld [vmem:[%s305 + $0x10] sm:$0xf]
      %v420 = vld [vmem:[%s305 + $0x14] sm:$0xf]
      %v421 = vld [vmem:[%s305 + $0x18] sm:$0xf]
      %v422 = vld [vmem:[%s305 + $0x1c] sm:$0xf]
      %v424 = vperm.slane %v414, 0
      %v434 = vunpack.c.l.b16 %v415
      %v435 = vunpack.c.l.b16 %v416
      %v436 = vunpack.c.l.b16 %v417
      %v437 = vunpack.c.l.b16 %v418
      %v438 = vunpack.c.l.b16 %v419
      %v439 = vunpack.c.l.b16 %v420
      %v440 = vunpack.c.l.b16 %v421
      %v441 = vunpack.c.l.b16 %v422
      %v442 = vpack.c.b16 %v435, %v434
      %v443 = vpack.c.b16 %v437, %v436
      %v444 = vpack.c.b16 %v439, %v438
      %v445 = vpack.c.b16 %v441, %v440
      %v448 = vunpack.c.l.b16 %v412
      %v449 = vunpack.c.l.b16 %v413
      %v450 = vpack.c.b16 %v449, %v448
      %vm452 = vcmask 130048
      %v454 = vsel %vm452, %v442, 0
      %v457 = vsel %vm452, %v443, 0
      %v460 = vsel %vm452, %v444, 0
      %v463 = vsel %vm452, %v445, 0
      %465 = vmatpush.bf16.msra.mxu0 0
      %466 = vmatpush.bf16.msra.mxu0 0
      %467 = vmatpush.bf16.msra.mxu0 0
      %468 = vmatpush.bf16.msra.mxu0 0
      %469 = vmatpush.bf16.msra.mxu0 0
      %470 = vmatpush.bf16.msra.mxu0 0
      %471 = vmatpush.bf16.msra.mxu0 0
      %472 = vmatpush.bf16.msra.mxu0 %v450
      %473 = vmatmul.bf16.gmra.mxu0 %v454
      %v474 = vpop.f32.mrf.mxu0
      %v475 = vadd.f32 %v424, %v474
      %v476 = vpop.f32.mrf.mxu0
      %v477 = vadd.f32 %v424, %v476
      %478 = vmatmul.bf16.gmra.mxu0 %v457
      %v479 = vpop.f32.mrf.mxu0
      %v480 = vadd.f32 %v424, %v479
      %v481 = vpop.f32.mrf.mxu0
      %v482 = vadd.f32 %v424, %v481
      %483 = vmatmul.bf16.gmra.mxu0 %v460
      %v484 = vpop.f32.mrf.mxu0
      %v485 = vadd.f32 %v424, %v484
      %v486 = vpop.f32.mrf.mxu0
      %v487 = vadd.f32 %v424, %v486
      %488 = vmatmul.bf16.gmra.mxu0 %v463
      %v489 = vpop.f32.mrf.mxu0
      %v490 = vadd.f32 %v424, %v489
      %v491 = vpop.f32.mrf.mxu0
      %v492 = vadd.f32 %v424, %v491
      %493 = vdwg.mxu0
      %v494 = vmax.f32 %v475, 0.0
      %v495 = vmax.f32 %v477, 0.0
      %v496 = vmax.f32 %v480, 0.0
      %v497 = vmax.f32 %v482, 0.0
      %v498 = vmax.f32 %v485, 0.0
      %v499 = vmax.f32 %v487, 0.0
      %v500 = vmax.f32 %v490, 0.0
      %v501 = vmax.f32 %v492, 0.0
      %v502 = vpack.c.bf16 %v494, %v494
      %v503 = vpack.c.bf16 %v495, %v495
      %v504 = vpack.c.bf16 %v496, %v496
      %v505 = vpack.c.bf16 %v497, %v497
      %v506 = vpack.c.bf16 %v498, %v498
      %v507 = vpack.c.bf16 %v499, %v499
      %v508 = vpack.c.bf16 %v500, %v500
      %v509 = vpack.c.bf16 %v501, %v501
      %s510 = smul.u32 4, 2
      %s511 = smul.u32 %s510, 1
      %s512 = sshll.u32 %s511, 4
      %513 = dma.done [#allocation4], %s512
      %s514 = sshll.u32 %s511, 4
      %515 = dma.done %s377, %s514
      %v516 = vld [vmem:[#allocation3] sm:$0xf]
      %v517 = vld [vmem:[#allocation3 + $0x4] sm:$0xf]
      %v518 = vld [vmem:[#allocation3 + $0x8] sm:$0xf]
      %v519 = vld [vmem:[#allocation3 + $0xc] sm:$0xf]
      %v524 = vunpack.c.l.b16 %v516
      %v525 = vunpack.c.l.b16 %v517
      %v526 = vunpack.c.l.b16 %v518
      %v527 = vunpack.c.l.b16 %v519
      %v528 = vpack.c.b16 %v525, %v524
      %v529 = vpack.c.b16 %v527, %v526
      %v531 = vsel %vm452, %v528, 0
      %v534 = vsel %vm452, %v529, 0
      %536 = vmatpush.bf16.msra.mxu0 0
      %537 = vmatpush.bf16.msra.mxu0 0
      %538 = vmatpush.bf16.msra.mxu0 0
      %539 = vmatpush.bf16.msra.mxu0 0
      %540 = vmatpush.bf16.msra.mxu0 0
      %541 = vmatpush.bf16.msra.mxu0 0
      %542 = vmatpush.bf16.msra.mxu0 0
      %543 = vmatpush.bf16.msra.mxu0 %v450
      %544 = vmatmul.bf16.gmra.mxu0 %v531
      %v545 = vpop.f32.mrf.mxu0
      %v546 = vadd.f32 %v424, %v545
      %v547 = vpop.f32.mrf.mxu0
      %v548 = vadd.f32 %v424, %v547
      %549 = vmatmul.bf16.gmra.mxu0 %v534
      %v550 = vpop.f32.mrf.mxu0
      %v551 = vadd.f32 %v424, %v550
      %v552 = vpop.f32.mrf.mxu0
      %v553 = vadd.f32 %v424, %v552
      %554 = vdwg.mxu0
      %v555 = vmax.f32 %v546, 0.0
      %v556 = vmax.f32 %v548, 0.0
      %v557 = vmax.f32 %v551, 0.0
      %v558 = vmax.f32 %v553, 0.0
      %p559 = scmp.gt.s32.totalorder %s24, 0
      %s560 = scalar_select %p559, 1, 0
      %v561 = vstv %s560
      %vm562 = vcmp.eq.s32.totalorder %v561, 1
      %v563 = vsel %vm562, %v555, 0.0
      %v564 = vsel %vm562, %v556, 0.0
      %v565 = vpack.c.bf16 %v563, %v563
      %v566 = vpack.c.bf16 %v564, %v564
      %p567 = scmp.lt.s32.totalorder %s24, 3
      %s568 = scalar_select %p567, 1, 0
      %v569 = vstv %s568
      %vm570 = vcmp.eq.s32.totalorder %v569, 1
      %v571 = vsel %vm570, %v557, 0.0
      %v572 = vsel %vm570, %v558, 0.0
      %v573 = vpack.c.bf16 %v571, %v571
      %v574 = vpack.c.bf16 %v572, %v572
      %vm575 = vcmask 27648
      %576 = vst.msk [vmem:[#allocation2 + $0x10] sm:$0xf] %vm575, %v565
      %577 = vst.msk [vmem:[#allocation2 + $0x14] sm:$0xf] %vm575, %v566
      %578 = vst.msk [vmem:[#allocation2 + $0x18] sm:$0xf] %vm575, %v502
      %579 = vst.msk [vmem:[#allocation2 + $0x1c] sm:$0xf] %vm575, %v503
      %580 = vst.msk [vmem:[#allocation2 + $0x20] sm:$0xf] %vm575, %v504
      %581 = vst.msk [vmem:[#allocation2 + $0x24] sm:$0xf] %vm575, %v505
      %582 = vst.msk [vmem:[#allocation2 + $0x28] sm:$0xf] %vm575, %v506
      %583 = vst.msk [vmem:[#allocation2 + $0x2c] sm:$0xf] %vm575, %v507
      %584 = vst.msk [vmem:[#allocation2 + $0x30] sm:$0xf] %vm575, %v508
      %585 = vst.msk [vmem:[#allocation2 + $0x34] sm:$0xf] %vm575, %v509
      %586 = vst.msk [vmem:[#allocation2 + $0x38] sm:$0xf] %vm575, %v573
      %587 = vst.msk [vmem:[#allocation2 + $0x3c] sm:$0xf] %vm575, %v574
      %590 = vrot.lane.b32.xlu0 %v565, 4
      %v591 = vpop.permute.xlu0 %590
      %592 = vrot.lane.b32.xlu0 %v566, 4
      %v593 = vpop.permute.xlu0 %592
      %vm596 = vcmask 60448
      %597 = vst.msk [vmem:[#allocation2 + $0x8] sm:$0xf] %vm596, %v591
      %598 = vst.msk [vmem:[#allocation2 + $0xc] sm:$0xf] %vm596, %v593
      %607 = vrot.lane.b32.xlu0 %v502, 4
      %v608 = vpop.permute.xlu0 %607
      %609 = vrot.lane.b32.xlu0 %v503, 4
      %v610 = vpop.permute.xlu0 %609
      %611 = vrot.lane.b32.xlu0 %v504, 4
      %v612 = vpop.permute.xlu0 %611
      %613 = vrot.lane.b32.xlu0 %v505, 4
      %v614 = vpop.permute.xlu0 %613
      %615 = vrot.lane.b32.xlu0 %v506, 4
      %v616 = vpop.permute.xlu0 %615
      %617 = vrot.lane.b32.xlu0 %v507, 4
      %v618 = vpop.permute.xlu0 %617
      %619 = vrot.lane.b32.xlu0 %v508, 4
      %v620 = vpop.permute.xlu0 %619
      %621 = vrot.lane.b32.xlu0 %v509, 4
      %v622 = vpop.permute.xlu0 %621
      %631 = vst.msk [vmem:[#allocation2 + $0x10] sm:$0xf] %vm596, %v608
      %632 = vst.msk [vmem:[#allocation2 + $0x14] sm:$0xf] %vm596, %v610
      %633 = vst.msk [vmem:[#allocation2 + $0x18] sm:$0xf] %vm596, %v612
      %634 = vst.msk [vmem:[#allocation2 + $0x1c] sm:$0xf] %vm596, %v614
      %635 = vst.msk [vmem:[#allocation2 + $0x20] sm:$0xf] %vm596, %v616
      %636 = vst.msk [vmem:[#allocation2 + $0x24] sm:$0xf] %vm596, %v618
      %637 = vst.msk [vmem:[#allocation2 + $0x28] sm:$0xf] %vm596, %v620
      %638 = vst.msk [vmem:[#allocation2 + $0x2c] sm:$0xf] %vm596, %v622
      %641 = vrot.lane.b32.xlu0 %v573, 4
      %v642 = vpop.permute.xlu0 %641
      %643 = vrot.lane.b32.xlu0 %v574, 4
      %v644 = vpop.permute.xlu0 %643
      %647 = vst.msk [vmem:[#allocation2 + $0x30] sm:$0xf] %vm596, %v642
      %648 = vst.msk [vmem:[#allocation2 + $0x34] sm:$0xf] %vm596, %v644
      %649 = vrot.lane.b32.xlu0 %v565, 8
      %v650 = vpop.permute.xlu0 %649
      %651 = vrot.lane.b32.xlu0 %v566, 8
      %v652 = vpop.permute.xlu0 %651
      %vm655 = vcmask 93248
      %656 = vst.msk [vmem:[#allocation2] sm:$0xf] %vm655, %v650
      %657 = vst.msk [vmem:[#allocation2 + $0x4] sm:$0xf] %vm655, %v652
      %658 = vrot.lane.b32.xlu0 %v502, 8
      %v659 = vpop.permute.xlu0 %658
      %660 = vrot.lane.b32.xlu0 %v503, 8
      %v661 = vpop.permute.xlu0 %660
      %662 = vrot.lane.b32.xlu0 %v504, 8
      %v663 = vpop.permute.xlu0 %662
      %664 = vrot.lane.b32.xlu0 %v505, 8
      %v665 = vpop.permute.xlu0 %664
      %666 = vrot.lane.b32.xlu0 %v506, 8
      %v667 = vpop.permute.xlu0 %666
      %668 = vrot.lane.b32.xlu0 %v507, 8
      %v669 = vpop.permute.xlu0 %668
      %670 = vrot.lane.b32.xlu0 %v508, 8
      %v671 = vpop.permute.xlu0 %670
      %672 = vrot.lane.b32.xlu0 %v509, 8
      %v673 = vpop.permute.xlu0 %672
      %682 = vst.msk [vmem:[#allocation2 + $0x8] sm:$0xf] %vm655, %v659
      %683 = vst.msk [vmem:[#allocation2 + $0xc] sm:$0xf] %vm655, %v661
      %684 = vst.msk [vmem:[#allocation2 + $0x10] sm:$0xf] %vm655, %v663
      %685 = vst.msk [vmem:[#allocation2 + $0x14] sm:$0xf] %vm655, %v665
      %686 = vst.msk [vmem:[#allocation2 + $0x18] sm:$0xf] %vm655, %v667
      %687 = vst.msk [vmem:[#allocation2 + $0x1c] sm:$0xf] %vm655, %v669
      %688 = vst.msk [vmem:[#allocation2 + $0x20] sm:$0xf] %vm655, %v671
      %689 = vst.msk [vmem:[#allocation2 + $0x24] sm:$0xf] %vm655, %v673
      %690 = vrot.lane.b32.xlu0 %v573, 8
      %v691 = vpop.permute.xlu0 %690
      %692 = vrot.lane.b32.xlu0 %v574, 8
      %v693 = vpop.permute.xlu0 %692
      %696 = vst.msk [vmem:[#allocation2 + $0x28] sm:$0xf] %vm655, %v691
      %697 = vst.msk [vmem:[#allocation2 + $0x2c] sm:$0xf] %vm655, %v693
      %v698 = vlaneseq
      %v699 = vshrl.u32 %v698, 7
      %v700 = vadd.s32 %v699, 8
      %v701 = vadd.s32 %v699, 16
      %v702 = vadd.s32 %v699, 24
      %v703 = vadd.s32 %v699, 32
      %v704 = vadd.s32 %v699, 40
      %v705 = vadd.s32 %v699, 48
      %v706 = vadd.s32 %v699, 56
      %vm707 = vcmp.lt.s32.totalorder %v699, 0
      %v708 = vsub.s32 0, %v699
      %v709 = vsel %vm707, %v708, %v699
      %v710 = vshrl.u32 %v709, 4
      %v711 = vand.u32 %v709, 15
      %v712 = vsub.s32 0, %v711
      %v713 = vsel %vm707, %v712, %v711
      %vm714 = vcmp.lt.s32.totalorder %v700, 0
      %v715 = vsub.s32 0, %v700
      %v716 = vsel %vm714, %v715, %v700
      %v717 = vshrl.u32 %v716, 4
      %v718 = vand.u32 %v716, 15
      %v719 = vsub.s32 0, %v718
      %v720 = vsel %vm714, %v719, %v718
      %vm721 = vcmp.lt.s32.totalorder %v701, 0
      %v722 = vsub.s32 0, %v701
      %v723 = vsel %vm721, %v722, %v701
      %v724 = vshrl.u32 %v723, 4
      %v725 = vand.u32 %v723, 15
      %v726 = vsub.s32 0, %v725
      %v727 = vsel %vm721, %v726, %v725
      %vm728 = vcmp.lt.s32.totalorder %v702, 0
      %v729 = vsub.s32 0, %v702
      %v730 = vsel %vm728, %v729, %v702
      %v731 = vshrl.u32 %v730, 4
      %v732 = vand.u32 %v730, 15
      %v733 = vsub.s32 0, %v732
      %v734 = vsel %vm728, %v733, %v732
      %vm735 = vcmp.lt.s32.totalorder %v703, 0
      %v736 = vsub.s32 0, %v703
      %v737 = vsel %vm735, %v736, %v703
      %v738 = vshrl.u32 %v737, 4
      %v739 = vand.u32 %v737, 15
      %v740 = vsub.s32 0, %v739
      %v741 = vsel %vm735, %v740, %v739
      %vm742 = vcmp.lt.s32.totalorder %v704, 0
      %v743 = vsub.s32 0, %v704
      %v744 = vsel %vm742, %v743, %v704
      %v745 = vshrl.u32 %v744, 4
      %v746 = vand.u32 %v744, 15
      %v747 = vsub.s32 0, %v746
      %v748 = vsel %vm742, %v747, %v746
      %vm749 = vcmp.lt.s32.totalorder %v705, 0
      %v750 = vsub.s32 0, %v705
      %v751 = vsel %vm749, %v750, %v705
      %v752 = vshrl.u32 %v751, 4
      %v753 = vand.u32 %v751, 15
      %v754 = vsub.s32 0, %v753
      %v755 = vsel %vm749, %v754, %v753
      %vm756 = vcmp.lt.s32.totalorder %v706, 0
      %v757 = vsub.s32 0, %v706
      %v758 = vsel %vm756, %v757, %v706
      %v759 = vshrl.u32 %v758, 4
      %v760 = vand.u32 %v758, 15
      %v761 = vsub.s32 0, %v760
      %v762 = vsel %vm756, %v761, %v760
      %vm763 = vcmp.ne.s32.totalorder %v713, 0
      %vm764 = vcmp.ne.s32.totalorder %v720, 0
      %vm765 = vcmp.ne.s32.totalorder %v727, 0
      %vm766 = vcmp.ne.s32.totalorder %v734, 0
      %vm767 = vcmp.ne.s32.totalorder %v741, 0
      %vm768 = vcmp.ne.s32.totalorder %v748, 0
      %vm769 = vcmp.ne.s32.totalorder %v755, 0
      %vm770 = vcmp.ne.s32.totalorder %v762, 0
      %vm771 = vcmp.lt.s32.totalorder %v713, 0
      %vm772 = vcmp.lt.s32.totalorder %v720, 0
      %vm773 = vcmp.lt.s32.totalorder %v727, 0
      %vm774 = vcmp.lt.s32.totalorder %v734, 0
      %vm775 = vcmp.lt.s32.totalorder %v741, 0
      %vm776 = vcmp.lt.s32.totalorder %v748, 0
      %vm777 = vcmp.lt.s32.totalorder %v755, 0
      %vm778 = vcmp.lt.s32.totalorder %v762, 0
      %vm779 = vmand %vm771, %vm763
      %vm780 = vmand %vm772, %vm764
      %vm781 = vmand %vm773, %vm765
      %vm782 = vmand %vm774, %vm766
      %vm783 = vmand %vm775, %vm767
      %vm784 = vmand %vm776, %vm768
      %vm785 = vmand %vm777, %vm769
      %vm786 = vmand %vm778, %vm770
      %v787 = vadd.s32 %v713, 16
      %v788 = vadd.s32 %v720, 16
      %v789 = vadd.s32 %v727, 16
      %v790 = vadd.s32 %v734, 16
      %v791 = vadd.s32 %v741, 16
      %v792 = vadd.s32 %v748, 16
      %v793 = vadd.s32 %v755, 16
      %v794 = vadd.s32 %v762, 16
      %v795 = vsel %vm779, %v787, %v713
      %v796 = vsel %vm780, %v788, %v720
      %v797 = vsel %vm781, %v789, %v727
      %v798 = vsel %vm782, %v790, %v734
      %v799 = vsel %vm783, %v791, %v741
      %v800 = vsel %vm784, %v792, %v748
      %v801 = vsel %vm785, %v793, %v755
      %v802 = vsel %vm786, %v794, %v762
      %vm803 = vcmp.gt.s32.totalorder %v795, 0
      %vm804 = vcmp.gt.s32.totalorder %v796, 0
      %vm805 = vcmp.gt.s32.totalorder %v797, 0
      %vm806 = vcmp.gt.s32.totalorder %v798, 0
      %vm807 = vcmp.gt.s32.totalorder %v799, 0
      %vm808 = vcmp.gt.s32.totalorder %v800, 0
      %vm809 = vcmp.gt.s32.totalorder %v801, 0
      %vm810 = vcmp.gt.s32.totalorder %v802, 0
      %vm811 = vcmp.lt.s32.totalorder %v795, 15
      %vm812 = vcmp.lt.s32.totalorder %v796, 15
      %vm813 = vcmp.lt.s32.totalorder %v797, 15
      %vm814 = vcmp.lt.s32.totalorder %v798, 15
      %vm815 = vcmp.lt.s32.totalorder %v799, 15
      %vm816 = vcmp.lt.s32.totalorder %v800, 15
      %vm817 = vcmp.lt.s32.totalorder %v801, 15
      %vm818 = vcmp.lt.s32.totalorder %v802, 15
      %v819 = vld [vmem:[#allocation2 + $0xc] sm:$0x8]
      %v820 = vld [vmem:[#allocation2 + $0x10] sm:$0xf]
      %v821 = vld [vmem:[#allocation2 + $0x14] sm:$0xf]
      %v822 = vld [vmem:[#allocation2 + $0x18] sm:$0xf]
      %v823 = vld [vmem:[#allocation2 + $0x1c] sm:$0xf]
      %v824 = vld [vmem:[#allocation2 + $0x20] sm:$0xf]
      %v825 = vld [vmem:[#allocation2 + $0x24] sm:$0xf]
      %v826 = vld [vmem:[#allocation2 + $0x28] sm:$0xf]
      %v827 = vld [vmem:[#allocation2 + $0x2c] sm:$0xf]
      %v828 = vsel %vm803, 1, 0
      %v829 = vsel %vm804, 1, 0
      %v830 = vsel %vm805, 1, 0
      %v831 = vsel %vm806, 1, 0
      %v832 = vsel %vm807, 1, 0
      %v833 = vsel %vm808, 1, 0
      %v834 = vsel %vm809, 1, 0
      %v835 = vsel %vm810, 1, 0
      %vm836 = vcmp.eq.s32.totalorder %v828, 1
      %vm837 = vcmp.eq.s32.totalorder %v829, 1
      %vm838 = vcmp.eq.s32.totalorder %v830, 1
      %vm839 = vcmp.eq.s32.totalorder %v831, 1
      %vm840 = vcmp.eq.s32.totalorder %v832, 1
      %vm841 = vcmp.eq.s32.totalorder %v833, 1
      %vm842 = vcmp.eq.s32.totalorder %v834, 1
      %vm843 = vcmp.eq.s32.totalorder %v835, 1
      %vm844 = vmpackc.low %vm836, %vm836
      %vm845 = vmpackc.low %vm837, %vm837
      %vm846 = vmpackc.low %vm838, %vm838
      %vm847 = vmpackc.low %vm839, %vm839
      %vm848 = vmpackc.low %vm840, %vm840
      %vm849 = vmpackc.low %vm841, %vm841
      %vm850 = vmpackc.low %vm842, %vm842
      %vm851 = vmpackc.low %vm843, %vm843
      %v852 = vsel %vm844, 65537, 0
      %v853 = vsel %vm845, 65537, 0
      %v854 = vsel %vm846, 65537, 0
      %v855 = vsel %vm847, 65537, 0
      %v856 = vsel %vm848, 65537, 0
      %v857 = vsel %vm849, 65537, 0
      %v858 = vsel %vm850, 65537, 0
      %v859 = vsel %vm851, 65537, 0
      %vm860 = vsmask.f32 3328
      %vm861 = vsmask.f32 7440
      %vm862 = vmor %vm860, %vm861
      %v864 = vshll.u32 %v852, 16
      %v866 = vrot.slane %v864, 5
      %v867 = vshrl.u32 %v852, 16
      %v869 = vrot.slane %v867, 4
      %v870 = vor.u32 %v869, %v866
      %v871 = vrot.slane %v870, 4
      %v873 = vshll.u32 %v853, 16
      %v875 = vrot.slane %v873, 5
      %v876 = vsel %vm862, %v871, %v875
      %v877 = vshrl.u32 %v853, 16
      %v879 = vrot.slane %v877, 4
      %v880 = vor.u32 %v879, %v875
      %v881 = vrot.slane %v880, 4
      %v883 = vshll.u32 %v854, 16
      %v885 = vrot.slane %v883, 5
      %v886 = vsel %vm862, %v881, %v885
      %v887 = vshrl.u32 %v854, 16
      %v889 = vrot.slane %v887, 4
      %v890 = vor.u32 %v889, %v885
      %v891 = vrot.slane %v890, 4
      %v893 = vshll.u32 %v855, 16
      %v895 = vrot.slane %v893, 5
      %v896 = vsel %vm862, %v891, %v895
      %v897 = vshrl.u32 %v855, 16
      %v899 = vrot.slane %v897, 4
      %v900 = vor.u32 %v899, %v895
      %v901 = vrot.slane %v900, 4
      %v903 = vshll.u32 %v856, 16
      %v905 = vrot.slane %v903, 5
      %v906 = vsel %vm862, %v901, %v905
      %v907 = vshrl.u32 %v856, 16
      %v909 = vrot.slane %v907, 4
      %v910 = vor.u32 %v909, %v905
      %v911 = vrot.slane %v910, 4
      %v913 = vshll.u32 %v857, 16
      %v915 = vrot.slane %v913, 5
      %v916 = vsel %vm862, %v911, %v915
      %v917 = vshrl.u32 %v857, 16
      %v919 = vrot.slane %v917, 4
      %v920 = vor.u32 %v919, %v915
      %v921 = vrot.slane %v920, 4
      %v923 = vshll.u32 %v858, 16
      %v925 = vrot.slane %v923, 5
      %v926 = vsel %vm862, %v921, %v925
      %v927 = vshrl.u32 %v858, 16
      %v929 = vrot.slane %v927, 4
      %v930 = vor.u32 %v929, %v925
      %v931 = vrot.slane %v930, 4
      %v933 = vshll.u32 %v859, 16
      %v935 = vrot.slane %v933, 5
      %v936 = vsel %vm862, %v931, %v935
      %v937 = vshrl.u32 %v859, 16
      %v939 = vrot.slane %v937, 4
      %v940 = vor.u32 %v939, %v935
      %v941 = vrot.slane %v940, 4
      %v942 = vunpack.c.l.b16 %v866
      %v943 = vunpack.c.h.b16 %v866
      %v944 = vunpack.c.l.b16 0
      %v945 = vunpack.c.h.b16 0
      %vm946 = vcmp.ne.s32.totalorder %v942, %v944
      %vm947 = vcmp.ne.s32.totalorder %v943, %v945
      %vm948 = vmpackc.low %vm947, %vm946
      %v949 = vunpack.c.l.b16 %v876
      %v950 = vunpack.c.h.b16 %v876
      %v951 = vunpack.c.l.b16 0
      %v952 = vunpack.c.h.b16 0
      %vm953 = vcmp.ne.s32.totalorder %v949, %v951
      %vm954 = vcmp.ne.s32.totalorder %v950, %v952
      %vm955 = vmpackc.low %vm954, %vm953
      %v956 = vunpack.c.l.b16 %v886
      %v957 = vunpack.c.h.b16 %v886
      %v958 = vunpack.c.l.b16 0
      %v959 = vunpack.c.h.b16 0
      %vm960 = vcmp.ne.s32.totalorder %v956, %v958
      %vm961 = vcmp.ne.s32.totalorder %v957, %v959
      %vm962 = vmpackc.low %vm961, %vm960
      %v963 = vunpack.c.l.b16 %v896
      %v964 = vunpack.c.h.b16 %v896
      %v965 = vunpack.c.l.b16 0
      %v966 = vunpack.c.h.b16 0
      %vm967 = vcmp.ne.s32.totalorder %v963, %v965
      %vm968 = vcmp.ne.s32.totalorder %v964, %v966
      %vm969 = vmpackc.low %vm968, %vm967
      %v970 = vunpack.c.l.b16 %v906
      %v971 = vunpack.c.h.b16 %v906
      %v972 = vunpack.c.l.b16 0
      %v973 = vunpack.c.h.b16 0
      %vm974 = vcmp.ne.s32.totalorder %v970, %v972
      %vm975 = vcmp.ne.s32.totalorder %v971, %v973
      %vm976 = vmpackc.low %vm975, %vm974
      %v977 = vunpack.c.l.b16 %v916
      %v978 = vunpack.c.h.b16 %v916
      %v979 = vunpack.c.l.b16 0
      %v980 = vunpack.c.h.b16 0
      %vm981 = vcmp.ne.s32.totalorder %v977, %v979
      %vm982 = vcmp.ne.s32.totalorder %v978, %v980
      %vm983 = vmpackc.low %vm982, %vm981
      %v984 = vunpack.c.l.b16 %v926
      %v985 = vunpack.c.h.b16 %v926
      %v986 = vunpack.c.l.b16 0
      %v987 = vunpack.c.h.b16 0
      %vm988 = vcmp.ne.s32.totalorder %v984, %v986
      %vm989 = vcmp.ne.s32.totalorder %v985, %v987
      %vm990 = vmpackc.low %vm989, %vm988
      %v991 = vunpack.c.l.b16 %v936
      %v992 = vunpack.c.h.b16 %v936
      %v993 = vunpack.c.l.b16 0
      %v994 = vunpack.c.h.b16 0
      %vm995 = vcmp.ne.s32.totalorder %v991, %v993
      %vm996 = vcmp.ne.s32.totalorder %v992, %v994
      %vm997 = vmpackc.low %vm996, %vm995
      %v998 = vunpack.c.l.b16 %v941
      %v999 = vunpack.c.h.b16 %v941
      %v1000 = vunpack.c.l.b16 0
      %v1001 = vunpack.c.h.b16 0
      %vm1002 = vcmp.ne.s32.totalorder %v998, %v1000
      %vm1003 = vcmp.ne.s32.totalorder %v999, %v1001
      %vm1004 = vmpackc.low %vm1003, %vm1002
      %v1005 = vsel %vm948, %v819, 0
      %v1006 = vsel %vm955, %v820, 0
      %v1007 = vsel %vm962, %v821, 0
      %v1008 = vsel %vm969, %v822, 0
      %v1009 = vsel %vm976, %v823, 0
      %v1010 = vsel %vm983, %v824, 0
      %v1011 = vsel %vm990, %v825, 0
      %v1012 = vsel %vm997, %v826, 0
      %v1013 = vsel %vm1004, %v827, 0
      %v1014 = vld [vmem:[%s3] sm:$0xf]
      %v1015 = vld [vmem:[%s3 + $0x4] sm:$0x3]
      %s1016 = scalar_lea.vmem %s3, 8
      %v1017 = vld [vmem:[%s1016] sm:$0xf]
      %v1018 = vld [vmem:[%s1016 + $0x4] sm:$0x3]
      %v1027 = vunpack.c.l.b16 %v820
      %v1028 = vunpack.c.l.b16 %v821
      %v1029 = vunpack.c.l.b16 %v822
      %v1030 = vunpack.c.l.b16 %v823
      %v1031 = vunpack.c.l.b16 %v824
      %v1032 = vunpack.c.l.b16 %v825
      %v1033 = vunpack.c.l.b16 %v826
      %v1034 = vunpack.c.l.b16 %v827
      %v1035 = vpack.c.b16 %v1028, %v1027
      %v1036 = vpack.c.b16 %v1030, %v1029
      %v1037 = vpack.c.b16 %v1032, %v1031
      %v1038 = vpack.c.b16 %v1034, %v1033
      %v1041 = vunpack.c.l.b16 %v1017
      %v1042 = vunpack.c.l.b16 %v1018
      %v1043 = vpack.c.b16 %v1042, %v1041
      %vm1044 = vcmask 97280
      %v1046 = vsel %vm1044, %v1035, 0
      %v1049 = vsel %vm1044, %v1036, 0
      %v1052 = vsel %vm1044, %v1037, 0
      %v1055 = vsel %vm1044, %v1038, 0
      %vm1057 = vcmask 1045504
      %v1059 = vsel %vm1057, %v1043, 0
      %1061 = vmatpush.bf16.msra.mxu0 0
      %1062 = vmatpush.bf16.msra.mxu0 0
      %1063 = vmatpush.bf16.msra.mxu0 0
      %1064 = vmatpush.bf16.msra.mxu0 0
      %1065 = vmatpush.bf16.msra.mxu0 0
      %1066 = vmatpush.bf16.msra.mxu0 0
      %1067 = vmatpush.bf16.msra.mxu0 0
      %1068 = vmatpush.bf16.msra.mxu0 %v1059
      %1069 = vmatmul.bf16.gmra.mxu0 %v1046
      %v1070 = vpop.f32.mrf.mxu0
      %v1071 = vadd.f32 0.0, %v1070
      %v1072 = vpop.f32.mrf.mxu0
      %v1073 = vadd.f32 0.0, %v1072
      %1074 = vmatmul.bf16.gmra.mxu0 %v1049
      %v1075 = vpop.f32.mrf.mxu0
      %v1076 = vadd.f32 0.0, %v1075
      %v1077 = vpop.f32.mrf.mxu0
      %v1078 = vadd.f32 0.0, %v1077
      %1079 = vmatmul.bf16.gmra.mxu0 %v1052
      %v1080 = vpop.f32.mrf.mxu0
      %v1081 = vadd.f32 0.0, %v1080
      %v1082 = vpop.f32.mrf.mxu0
      %v1083 = vadd.f32 0.0, %v1082
      %1084 = vmatmul.bf16.gmra.mxu0 %v1055
      %v1085 = vpop.f32.mrf.mxu0
      %v1086 = vadd.f32 0.0, %v1085
      %v1087 = vpop.f32.mrf.mxu0
      %v1088 = vadd.f32 0.0, %v1087
      %1089 = vdwg.mxu0
      %v1099 = vunpack.c.l.b16 %v1005
      %v1100 = vunpack.c.l.b16 %v1006
      %v1101 = vunpack.c.l.b16 %v1007
      %v1102 = vunpack.c.l.b16 %v1008
      %v1103 = vunpack.c.l.b16 %v1009
      %v1104 = vunpack.c.l.b16 %v1010
      %v1105 = vunpack.c.l.b16 %v1011
      %v1106 = vunpack.c.l.b16 %v1012
      %v1107 = vunpack.c.l.b16 %v1013
      %v1108 = vpack.c.b16 %v1100, %v1099
      %v1109 = vpack.c.b16 %v1102, %v1101
      %v1110 = vpack.c.b16 %v1104, %v1103
      %v1111 = vpack.c.b16 %v1106, %v1105
      %v1112 = vpack.c.b16 %v1107, %v1107
      %vm1113 = vsmask.f32 4352
      %v1115 = vshrl.u32 %v1108, 16
      %v1117 = vrot.slane %v1115, 3
      %v1118 = vshll.u32 %v1108, 16
      %v1120 = vrot.slane %v1118, 4
      %v1121 = vor.u32 %v1117, %v1120
      %v1123 = vshrl.u32 %v1109, 16
      %v1125 = vrot.slane %v1123, 3
      %v1126 = vshll.u32 %v1109, 16
      %v1128 = vrot.slane %v1126, 4
      %v1129 = vor.u32 %v1125, %v1128
      %v1130 = vsel %vm1113, %v1121, %v1129
      %v1132 = vshrl.u32 %v1110, 16
      %v1134 = vrot.slane %v1132, 3
      %v1135 = vshll.u32 %v1110, 16
      %v1137 = vrot.slane %v1135, 4
      %v1138 = vor.u32 %v1134, %v1137
      %v1139 = vsel %vm1113, %v1129, %v1138
      %v1141 = vshrl.u32 %v1111, 16
      %v1143 = vrot.slane %v1141, 3
      %v1144 = vshll.u32 %v1111, 16
      %v1146 = vrot.slane %v1144, 4
      %v1147 = vor.u32 %v1143, %v1146
      %v1148 = vsel %vm1113, %v1138, %v1147
      %v1150 = vshrl.u32 %v1112, 16
      %v1152 = vrot.slane %v1150, 3
      %v1153 = vshll.u32 %v1112, 16
      %v1155 = vrot.slane %v1153, 4
      %v1156 = vor.u32 %v1152, %v1155
      %v1157 = vsel %vm1113, %v1147, %v1156
      %v1160 = vunpack.c.l.b16 %v1014
      %v1161 = vunpack.c.l.b16 %v1015
      %v1162 = vpack.c.b16 %v1161, %v1160
      %v1164 = vsel %vm1044, %v1130, 0
      %v1167 = vsel %vm1044, %v1139, 0
      %v1170 = vsel %vm1044, %v1148, 0
      %v1173 = vsel %vm1044, %v1157, 0
      %v1176 = vsel %vm1057, %v1162, 0
      %1178 = vmatpush.bf16.msra.mxu0 0
      %1179 = vmatpush.bf16.msra.mxu0 0
      %1180 = vmatpush.bf16.msra.mxu0 0
      %1181 = vmatpush.bf16.msra.mxu0 0
      %1182 = vmatpush.bf16.msra.mxu0 0
      %1183 = vmatpush.bf16.msra.mxu0 0
      %1184 = vmatpush.bf16.msra.mxu0 0
      %1185 = vmatpush.bf16.msra.mxu0 %v1176
      %1186 = vmatmul.bf16.gmra.mxu0 %v1164
      %v1187 = vpop.f32.mrf.mxu0
      %v1188 = vadd.f32 %v1071, %v1187
      %v1189 = vpop.f32.mrf.mxu0
      %v1190 = vadd.f32 %v1073, %v1189
      %1191 = vmatmul.bf16.gmra.mxu0 %v1167
      %v1192 = vpop.f32.mrf.mxu0
      %v1193 = vadd.f32 %v1076, %v1192
      %v1194 = vpop.f32.mrf.mxu0
      %v1195 = vadd.f32 %v1078, %v1194
      %1196 = vmatmul.bf16.gmra.mxu0 %v1170
      %v1197 = vpop.f32.mrf.mxu0
      %v1198 = vadd.f32 %v1081, %v1197
      %v1199 = vpop.f32.mrf.mxu0
      %v1200 = vadd.f32 %v1083, %v1199
      %1201 = vmatmul.bf16.gmra.mxu0 %v1173
      %v1202 = vpop.f32.mrf.mxu0
      %v1203 = vadd.f32 %v1086, %v1202
      %v1204 = vpop.f32.mrf.mxu0
      %v1205 = vadd.f32 %v1088, %v1204
      %1206 = vdwg.mxu0
      %v1207 = vld [vmem:[#allocation2 + $0x10] sm:$0xf]
      %v1208 = vld [vmem:[#allocation2 + $0x14] sm:$0xf]
      %v1209 = vld [vmem:[#allocation2 + $0x18] sm:$0xf]
      %v1210 = vld [vmem:[#allocation2 + $0x1c] sm:$0xf]
      %v1211 = vld [vmem:[#allocation2 + $0x20] sm:$0xf]
      %v1212 = vld [vmem:[#allocation2 + $0x24] sm:$0xf]
      %v1213 = vld [vmem:[#allocation2 + $0x28] sm:$0xf]
      %v1214 = vld [vmem:[#allocation2 + $0x2c] sm:$0xf]
      %v1215 = vld [vmem:[#allocation2 + $0x30] sm:$0x1]
      %v1216 = vsel %vm811, 1, 0
      %v1217 = vsel %vm812, 1, 0
      %v1218 = vsel %vm813, 1, 0
      %v1219 = vsel %vm814, 1, 0
      %v1220 = vsel %vm815, 1, 0
      %v1221 = vsel %vm816, 1, 0
      %v1222 = vsel %vm817, 1, 0
      %v1223 = vsel %vm818, 1, 0
      %vm1224 = vcmp.eq.s32.totalorder %v1216, 1
      %vm1225 = vcmp.eq.s32.totalorder %v1217, 1
      %vm1226 = vcmp.eq.s32.totalorder %v1218, 1
      %vm1227 = vcmp.eq.s32.totalorder %v1219, 1
      %vm1228 = vcmp.eq.s32.totalorder %v1220, 1
      %vm1229 = vcmp.eq.s32.totalorder %v1221, 1
      %vm1230 = vcmp.eq.s32.totalorder %v1222, 1
      %vm1231 = vcmp.eq.s32.totalorder %v1223, 1
      %vm1232 = vmpackc.low %vm1224, %vm1224
      %vm1233 = vmpackc.low %vm1225, %vm1225
      %vm1234 = vmpackc.low %vm1226, %vm1226
      %vm1235 = vmpackc.low %vm1227, %vm1227
      %vm1236 = vmpackc.low %vm1228, %vm1228
      %vm1237 = vmpackc.low %vm1229, %vm1229
      %vm1238 = vmpackc.low %vm1230, %vm1230
      %vm1239 = vmpackc.low %vm1231, %vm1231
      %v1240 = vsel %vm1232, 65537, 0
      %v1241 = vsel %vm1233, 65537, 0
      %v1242 = vsel %vm1234, 65537, 0
      %v1243 = vsel %vm1235, 65537, 0
      %v1244 = vsel %vm1236, 65537, 0
      %v1245 = vsel %vm1237, 65537, 0
      %v1246 = vsel %vm1238, 65537, 0
      %v1247 = vsel %vm1239, 65537, 0
      %vm1248 = vsmask.f32 256
      %vm1249 = vsmask.f32 4368
      %vm1250 = vmor %vm1248, %vm1249
      %v1252 = vshrl.u32 %v1240, 16
      %v1254 = vrot.slane %v1252, 7
      %v1255 = vshll.u32 %v1240, 16
      %v1257 = vor.u32 %v1254, %v1255
      %v1258 = vrot.slane %v1254, 4
      %v1260 = vshrl.u32 %v1241, 16
      %v1262 = vrot.slane %v1260, 7
      %v1263 = vshll.u32 %v1241, 16
      %v1265 = vor.u32 %v1262, %v1263
      %v1266 = vsel %vm1250, %v1258, %v1265
      %v1267 = vrot.slane %v1262, 4
      %v1269 = vshrl.u32 %v1242, 16
      %v1271 = vrot.slane %v1269, 7
      %v1272 = vshll.u32 %v1242, 16
      %v1274 = vor.u32 %v1271, %v1272
      %v1275 = vsel %vm1250, %v1267, %v1274
      %v1276 = vrot.slane %v1271, 4
      %v1278 = vshrl.u32 %v1243, 16
      %v1280 = vrot.slane %v1278, 7
      %v1281 = vshll.u32 %v1243, 16
      %v1283 = vor.u32 %v1280, %v1281
      %v1284 = vsel %vm1250, %v1276, %v1283
      %v1285 = vrot.slane %v1280, 4
      %v1287 = vshrl.u32 %v1244, 16
      %v1289 = vrot.slane %v1287, 7
      %v1290 = vshll.u32 %v1244, 16
      %v1292 = vor.u32 %v1289, %v1290
      %v1293 = vsel %vm1250, %v1285, %v1292
      %v1294 = vrot.slane %v1289, 4
      %v1296 = vshrl.u32 %v1245, 16
      %v1298 = vrot.slane %v1296, 7
      %v1299 = vshll.u32 %v1245, 16
      %v1301 = vor.u32 %v1298, %v1299
      %v1302 = vsel %vm1250, %v1294, %v1301
      %v1303 = vrot.slane %v1298, 4
      %v1305 = vshrl.u32 %v1246, 16
      %v1307 = vrot.slane %v1305, 7
      %v1308 = vshll.u32 %v1246, 16
      %v1310 = vor.u32 %v1307, %v1308
      %v1311 = vsel %vm1250, %v1303, %v1310
      %v1312 = vrot.slane %v1307, 4
      %v1314 = vshrl.u32 %v1247, 16
      %v1316 = vrot.slane %v1314, 7
      %v1317 = vshll.u32 %v1247, 16
      %v1319 = vor.u32 %v1316, %v1317
      %v1320 = vsel %vm1250, %v1312, %v1319
      %v1321 = vrot.slane %v1316, 4
      %v1322 = vunpack.c.l.b16 %v1257
      %v1323 = vunpack.c.h.b16 %v1257
      %v1324 = vunpack.c.l.b16 0
      %v1325 = vunpack.c.h.b16 0
      %vm1326 = vcmp.ne.s32.totalorder %v1322, %v1324
      %vm1327 = vcmp.ne.s32.totalorder %v1323, %v1325
      %vm1328 = vmpackc.low %vm1327, %vm1326
      %v1329 = vunpack.c.l.b16 %v1266
      %v1330 = vunpack.c.h.b16 %v1266
      %v1331 = vunpack.c.l.b16 0
      %v1332 = vunpack.c.h.b16 0
      %vm1333 = vcmp.ne.s32.totalorder %v1329, %v1331
      %vm1334 = vcmp.ne.s32.totalorder %v1330, %v1332
      %vm1335 = vmpackc.low %vm1334, %vm1333
      %v1336 = vunpack.c.l.b16 %v1275
      %v1337 = vunpack.c.h.b16 %v1275
      %v1338 = vunpack.c.l.b16 0
      %v1339 = vunpack.c.h.b16 0
      %vm1340 = vcmp.ne.s32.totalorder %v1336, %v1338
      %vm1341 = vcmp.ne.s32.totalorder %v1337, %v1339
      %vm1342 = vmpackc.low %vm1341, %vm1340
      %v1343 = vunpack.c.l.b16 %v1284
      %v1344 = vunpack.c.h.b16 %v1284
      %v1345 = vunpack.c.l.b16 0
      %v1346 = vunpack.c.h.b16 0
      %vm1347 = vcmp.ne.s32.totalorder %v1343, %v1345
      %vm1348 = vcmp.ne.s32.totalorder %v1344, %v1346
      %vm1349 = vmpackc.low %vm1348, %vm1347
      %v1350 = vunpack.c.l.b16 %v1293
      %v1351 = vunpack.c.h.b16 %v1293
      %v1352 = vunpack.c.l.b16 0
      %v1353 = vunpack.c.h.b16 0
      %vm1354 = vcmp.ne.s32.totalorder %v1350, %v1352
      %vm1355 = vcmp.ne.s32.totalorder %v1351, %v1353
      %vm1356 = vmpackc.low %vm1355, %vm1354
      %v1357 = vunpack.c.l.b16 %v1302
      %v1358 = vunpack.c.h.b16 %v1302
      %v1359 = vunpack.c.l.b16 0
      %v1360 = vunpack.c.h.b16 0
      %vm1361 = vcmp.ne.s32.totalorder %v1357, %v1359
      %vm1362 = vcmp.ne.s32.totalorder %v1358, %v1360
      %vm1363 = vmpackc.low %vm1362, %vm1361
      %v1364 = vunpack.c.l.b16 %v1311
      %v1365 = vunpack.c.h.b16 %v1311
      %v1366 = vunpack.c.l.b16 0
      %v1367 = vunpack.c.h.b16 0
      %vm1368 = vcmp.ne.s32.totalorder %v1364, %v1366
      %vm1369 = vcmp.ne.s32.totalorder %v1365, %v1367
      %vm1370 = vmpackc.low %vm1369, %vm1368
      %v1371 = vunpack.c.l.b16 %v1320
      %v1372 = vunpack.c.h.b16 %v1320
      %v1373 = vunpack.c.l.b16 0
      %v1374 = vunpack.c.h.b16 0
      %vm1375 = vcmp.ne.s32.totalorder %v1371, %v1373
      %vm1376 = vcmp.ne.s32.totalorder %v1372, %v1374
      %vm1377 = vmpackc.low %vm1376, %vm1375
      %v1378 = vunpack.c.l.b16 %v1321
      %v1379 = vunpack.c.h.b16 %v1321
      %v1380 = vunpack.c.l.b16 0
      %v1381 = vunpack.c.h.b16 0
      %vm1382 = vcmp.ne.s32.totalorder %v1378, %v1380
      %vm1383 = vcmp.ne.s32.totalorder %v1379, %v1381
      %vm1384 = vmpackc.low %vm1383, %vm1382
      %v1385 = vsel %vm1328, %v1207, 0
      %v1386 = vsel %vm1335, %v1208, 0
      %v1387 = vsel %vm1342, %v1209, 0
      %v1388 = vsel %vm1349, %v1210, 0
      %v1389 = vsel %vm1356, %v1211, 0
      %v1390 = vsel %vm1363, %v1212, 0
      %v1391 = vsel %vm1370, %v1213, 0
      %v1392 = vsel %vm1377, %v1214, 0
      %v1393 = vsel %vm1384, %v1215, 0
      %s1394 = scalar_lea.vmem %s3, 16
      %v1395 = vld [vmem:[%s1394] sm:$0xf]
      %v1396 = vld [vmem:[%s1394 + $0x4] sm:$0x3]
      %v1406 = vunpack.c.l.b16 %v1385
      %v1407 = vunpack.c.l.b16 %v1386
      %v1408 = vunpack.c.l.b16 %v1387
      %v1409 = vunpack.c.l.b16 %v1388
      %v1410 = vunpack.c.l.b16 %v1389
      %v1411 = vunpack.c.l.b16 %v1390
      %v1412 = vunpack.c.l.b16 %v1391
      %v1413 = vunpack.c.l.b16 %v1392
      %v1414 = vunpack.c.l.b16 %v1393
      %v1415 = vpack.c.b16 %v1407, %v1406
      %v1416 = vpack.c.b16 %v1409, %v1408
      %v1417 = vpack.c.b16 %v1411, %v1410
      %v1418 = vpack.c.b16 %v1413, %v1412
      %v1419 = vpack.c.b16 %v1414, %v1414
      %vm1420 = vsmask.f32 7424
      %v1422 = vshrl.u32 %v1415, 16
      %v1424 = vshll.u32 %v1415, 16
      %v1426 = vrot.slane %v1424, 1
      %v1427 = vor.u32 %v1422, %v1426
      %v1429 = vshll.u32 %v1416, 16
      %v1431 = vrot.slane %v1429, 1
      %v1432 = vsel %vm1420, %v1427, %v1431
      %v1433 = vshrl.u32 %v1416, 16
      %v1435 = vor.u32 %v1433, %v1431
      %v1437 = vshll.u32 %v1417, 16
      %v1439 = vrot.slane %v1437, 1
      %v1440 = vsel %vm1420, %v1435, %v1439
      %v1441 = vshrl.u32 %v1417, 16
      %v1443 = vor.u32 %v1441, %v1439
      %v1445 = vshll.u32 %v1418, 16
      %v1447 = vrot.slane %v1445, 1
      %v1448 = vsel %vm1420, %v1443, %v1447
      %v1449 = vshrl.u32 %v1418, 16
      %v1451 = vor.u32 %v1449, %v1447
      %v1453 = vshll.u32 %v1419, 16
      %v1455 = vrot.slane %v1453, 1
      %v1456 = vsel %vm1420, %v1451, %v1455
      %v1459 = vunpack.c.l.b16 %v1395
      %v1460 = vunpack.c.l.b16 %v1396
      %v1461 = vpack.c.b16 %v1460, %v1459
      %v1463 = vsel %vm1044, %v1432, 0
      %v1466 = vsel %vm1044, %v1440, 0
      %v1469 = vsel %vm1044, %v1448, 0
      %v1472 = vsel %vm1044, %v1456, 0
      %v1475 = vsel %vm1057, %v1461, 0
      %1477 = vmatpush.bf16.msra.mxu0 0
      %1478 = vmatpush.bf16.msra.mxu0 0
      %1479 = vmatpush.bf16.msra.mxu0 0
      %1480 = vmatpush.bf16.msra.mxu0 0
      %1481 = vmatpush.bf16.msra.mxu0 0
      %1482 = vmatpush.bf16.msra.mxu0 0
      %1483 = vmatpush.bf16.msra.mxu0 0
      %1484 = vmatpush.bf16.msra.mxu0 %v1475
      %1485 = vmatmul.bf16.gmra.mxu0 %v1463
      %v1486 = vpop.f32.mrf.mxu0
      %v1487 = vadd.f32 0.0, %v1486
      %v1488 = vpop.f32.mrf.mxu0
      %v1489 = vadd.f32 0.0, %v1488
      %1490 = vmatmul.bf16.gmra.mxu0 %v1466
      %v1491 = vpop.f32.mrf.mxu0
      %v1492 = vadd.f32 0.0, %v1491
      %v1493 = vpop.f32.mrf.mxu0
      %v1494 = vadd.f32 0.0, %v1493
      %1495 = vmatmul.bf16.gmra.mxu0 %v1469
      %v1496 = vpop.f32.mrf.mxu0
      %v1497 = vadd.f32 0.0, %v1496
      %v1498 = vpop.f32.mrf.mxu0
      %v1499 = vadd.f32 0.0, %v1498
      %1500 = vmatmul.bf16.gmra.mxu0 %v1472
      %v1501 = vpop.f32.mrf.mxu0
      %v1502 = vadd.f32 0.0, %v1501
      %v1503 = vpop.f32.mrf.mxu0
      %v1504 = vadd.f32 0.0, %v1503
      %1505 = vdwg.mxu0
      %v1506 = vadd.f32 %v1188, %v1487
      %v1507 = vadd.f32 %v1190, %v1489
      %v1508 = vadd.f32 %v1193, %v1492
      %v1509 = vadd.f32 %v1195, %v1494
      %v1510 = vadd.f32 %v1198, %v1497
      %v1511 = vadd.f32 %v1200, %v1499
      %v1512 = vadd.f32 %v1203, %v1502
      %v1513 = vadd.f32 %v1205, %v1504
      %v1514 = vld [vmem:[%s4] sm:$0x1]
      %v1516 = vperm.slane %v1514, 0
      %v1518 = vadd.f32 %v1506, %v1516
      %v1519 = vadd.f32 %v1507, %v1516
      %v1520 = vadd.f32 %v1508, %v1516
      %v1521 = vadd.f32 %v1509, %v1516
      %v1522 = vadd.f32 %v1510, %v1516
      %v1523 = vadd.f32 %v1511, %v1516
      %v1524 = vadd.f32 %v1512, %v1516
      %v1525 = vadd.f32 %v1513, %v1516
      %v1526 = vmax.f32 %v1518, 0.0
      %v1527 = vmax.f32 %v1519, 0.0
      %v1528 = vmax.f32 %v1520, 0.0
      %v1529 = vmax.f32 %v1521, 0.0
      %v1530 = vmax.f32 %v1522, 0.0
      %v1531 = vmax.f32 %v1523, 0.0
      %v1532 = vmax.f32 %v1524, 0.0
      %v1533 = vmax.f32 %v1525, 0.0
      %v1534 = vpack.c.bf16 %v1527, %v1526
      %v1535 = vpack.c.bf16 %v1529, %v1528
      %v1536 = vpack.c.bf16 %v1531, %v1530
      %v1537 = vpack.c.bf16 %v1533, %v1532
      %v1538 = vld [vmem:[%s5] sm:$0x3]
      %v1539 = vld [vmem:[%s6] sm:$0x1]
      %v1541 = vperm.slane %v1539, 0
      %vm1543 = vcmask 31744
      %v1545 = vsel %vm1543, %v1534, 0
      %v1548 = vsel %vm1543, %v1535, 0
      %v1551 = vsel %vm1543, %v1536, 0
      %v1554 = vsel %vm1543, %v1537, 0
      %vm1556 = vcmask 1041408
      %v1558 = vsel %vm1556, %v1538, 0
      %1560 = vmatpush.bf16.msra.mxu0 0
      %1561 = vmatpush.bf16.msra.mxu0 0
      %1562 = vmatpush.bf16.msra.mxu0 0
      %1563 = vmatpush.bf16.msra.mxu0 0
      %1564 = vmatpush.bf16.msra.mxu0 0
      %1565 = vmatpush.bf16.msra.mxu0 0
      %1566 = vmatpush.bf16.msra.mxu0 0
      %1567 = vmatpush.bf16.msra.mxu0 %v1558
      %1568 = vmatmul.bf16.gmra.mxu0 %v1545
      %v1569 = vpop.f32.mrf.mxu0
      %v1570 = vadd.f32 %v1541, %v1569
      %v1571 = vpop.f32.mrf.mxu0
      %v1572 = vadd.f32 %v1541, %v1571
      %1573 = vmatmul.bf16.gmra.mxu0 %v1548
      %v1574 = vpop.f32.mrf.mxu0
      %v1575 = vadd.f32 %v1541, %v1574
      %v1576 = vpop.f32.mrf.mxu0
      %v1577 = vadd.f32 %v1541, %v1576
      %1578 = vmatmul.bf16.gmra.mxu0 %v1551
      %v1579 = vpop.f32.mrf.mxu0
      %v1580 = vadd.f32 %v1541, %v1579
      %v1581 = vpop.f32.mrf.mxu0
      %v1582 = vadd.f32 %v1541, %v1581
      %1583 = vmatmul.bf16.gmra.mxu0 %v1554
      %v1584 = vpop.f32.mrf.mxu0
      %v1585 = vadd.f32 %v1541, %v1584
      %v1586 = vpop.f32.mrf.mxu0
      %v1587 = vadd.f32 %v1541, %v1586
      %1588 = vdwg.mxu0
      %v1589 = vmax.f32 %v1570, 0.0
      %v1590 = vmax.f32 %v1572, 0.0
      %v1591 = vmax.f32 %v1575, 0.0
      %v1592 = vmax.f32 %v1577, 0.0
      %v1593 = vmax.f32 %v1580, 0.0
      %v1594 = vmax.f32 %v1582, 0.0
      %v1595 = vmax.f32 %v1585, 0.0
      %v1596 = vmax.f32 %v1587, 0.0
      %v1597 = vld [vmem:[%s305] sm:$0xf]
      %v1598 = vld [vmem:[%s305 + $0x4] sm:$0xf]
      %v1599 = vld [vmem:[%s305 + $0x8] sm:$0xf]
      %v1600 = vld [vmem:[%s305 + $0xc] sm:$0xf]
      %v1601 = vld [vmem:[%s305 + $0x10] sm:$0xf]
      %v1602 = vld [vmem:[%s305 + $0x14] sm:$0xf]
      %v1603 = vld [vmem:[%s305 + $0x18] sm:$0xf]
      %v1604 = vld [vmem:[%s305 + $0x1c] sm:$0xf]
      %v1605 = vunpack.c.l.bf16 %v1597
      %v1606 = vunpack.c.l.bf16 %v1598
      %v1607 = vunpack.c.l.bf16 %v1599
      %v1608 = vunpack.c.l.bf16 %v1600
      %v1609 = vunpack.c.l.bf16 %v1601
      %v1610 = vunpack.c.l.bf16 %v1602
      %v1611 = vunpack.c.l.bf16 %v1603
      %v1612 = vunpack.c.l.bf16 %v1604
      %v1613 = vadd.f32 %v1589, %v1605
      %v1614 = vadd.f32 %v1590, %v1606
      %v1615 = vadd.f32 %v1591, %v1607
      %v1616 = vadd.f32 %v1592, %v1608
      %v1617 = vadd.f32 %v1593, %v1609
      %v1618 = vadd.f32 %v1594, %v1610
      %v1619 = vadd.f32 %v1595, %v1611
      %v1620 = vadd.f32 %v1596, %v1612
      %v1621 = vmax.f32 %v1613, 0.0
      %v1622 = vmax.f32 %v1614, 0.0
      %v1623 = vmax.f32 %v1615, 0.0
      %v1624 = vmax.f32 %v1616, 0.0
      %v1625 = vmax.f32 %v1617, 0.0
      %v1626 = vmax.f32 %v1618, 0.0
      %v1627 = vmax.f32 %v1619, 0.0
      %v1628 = vmax.f32 %v1620, 0.0
      %v1629 = vpack.c.bf16 %v1621, %v1621
      %v1630 = vpack.c.bf16 %v1622, %v1622
      %v1631 = vpack.c.bf16 %v1623, %v1623
      %v1632 = vpack.c.bf16 %v1624, %v1624
      %v1633 = vpack.c.bf16 %v1625, %v1625
      %v1634 = vpack.c.bf16 %v1626, %v1626
      %v1635 = vpack.c.bf16 %v1627, %v1627
      %v1636 = vpack.c.bf16 %v1628, %v1628
      %vm1637 = vcmask 125952
      %1638 = vst.msk [vmem:[%s315] sm:$0xf] %vm1637, %v1629
      %1639 = vst.msk [vmem:[%s315 + $0x4] sm:$0xf] %vm1637, %v1630
      %1640 = vst.msk [vmem:[%s315 + $0x8] sm:$0xf] %vm1637, %v1631
      %1641 = vst.msk [vmem:[%s315 + $0xc] sm:$0xf] %vm1637, %v1632
      %1642 = vst.msk [vmem:[%s315 + $0x10] sm:$0xf] %vm1637, %v1633
      %1643 = vst.msk [vmem:[%s315 + $0x14] sm:$0xf] %vm1637, %v1634
      %1644 = vst.msk [vmem:[%s315 + $0x18] sm:$0xf] %vm1637, %v1635
      %1645 = vst.msk [vmem:[%s315 + $0x1c] sm:$0xf] %vm1637, %v1636
      %s1646 = smul.u32 %s23, 4
      %s1647 = sadd.s32 %s1646, %s24
      %s1648 = smul.u32 8, %s1647
      %p1649 = scmp.lt.s32.totalorder %s1648, 63
      %s1650 = scalar_select %p1649, %s1648, 63
      %s1651 = smul.addr %s1650, 4
      %s1652 = scalar_lea.vmem %s8, %s1651
      // Predicated region
      $region117: #{bottleneck_forward.1} parent=47 // pred_check
        %p1653 = pneg %p209
      $region118: #{bottleneck_forward.1} parent=47 // pred_check_branch
        %1655 = sbr.rel (%p1653) target = $region120
      $region119: #{bottleneck_forward.1} parent=47 // pred_region
        %s1656 = smul.u32 %s23, 4
        %s1657 = sadd.s32 %s1656, %s24
        %s1658 = smul.u32 8, %s1657
      $region120: #{bottleneck_forward.1} parent=47 // pred_fallthru
        _
    $region48: #{bottleneck_forward.1} parent=5 // pred_fallthru
      _
    %p1659 = scmp.le.s32.totalorder 2, %s14
    // Predicated region
    $region121: #{bottleneck_forward.1} parent=5 // pred_check
      %p1660 = pneg %p1659
    $region122: #{bottleneck_forward.1} parent=5 // pred_check_branch
      %1662 = sbr.rel (%p1660) target = $region124
    $region123: #{bottleneck_forward.1} parent=5 // pred_region
      %s1663 = ssub.s32 %s14, 2
      // Predicated region
      $region125: #{bottleneck_forward.1} parent=123 // pred_check
        %p1664 = pneg %p215
      $region126: #{bottleneck_forward.1} parent=123 // pred_check_branch
        %1666 = sbr.rel (%p1664) target = $region128
      $region127: #{bottleneck_forward.1} parent=123 // pred_region
        %s1667 = smul.u32 %s25, 4
        %s1668 = sadd.s32 %s1667, %s26
        %s1669 = smul.u32 8, %s1668
        %p1670 = scmp.lt.s32.totalorder %s1669, 63
        %s1671 = scalar_select %p1670, %s1669, 63
        %s1672 = smul.addr %s1671, 4
        %s1673 = scalar_lea.vmem %s8, %s1672
      $region128: #{bottleneck_forward.1} parent=123 // pred_fallthru
        _
    $region124: #{bottleneck_forward.1} parent=5 // pred_fallthru
      _
  $region6: #{bottleneck_forward.1} parent=0 // loop_footer
    %s18 = sadd.s32 1, %s14
  $region7: #{bottleneck_forward.1} parent=0 // loop_footer_branch
    %13 = sbr.rel target = $region3
  $region8: #{bottleneck_forward.1} parent=0 // loop_exit
    _
  %1674 = vsyncmov [#allocation4]
  %s1675 = vpop.sfrf %1674
  %p1676 = scmp.eq.s32.totalorder %s1675, 0
  %p1677 = pneg %p1676
  %1679 = shalt.err (%p1677)
  %s1680 = scalar_lea.sflag [#allocation4], 1
  %1681 = vsyncmov %s1680
  %s1682 = vpop.sfrf %1681
  %p1683 = scmp.eq.s32.totalorder %s1682, 0
  %p1684 = pneg %p1683
  %1686 = shalt.err (%p1684)

</llo_original>
